<compile_context>
chip_gen: v5e
topology: v5e:2x2
jax: 0.10.0
libtpu: 0.0.40
codegen_flags: <defaults>
</compile_context>

<pallas_src>
import jax
import jax.numpy as jnp
from jax.experimental import pallas as pl
from jax.experimental.pallas import tpu as pltpu

BN_EPS = 1e-5
LEAKY_SLOPE = 0.2

D_IN = 784
H1 = 512
H2 = 256


def _cdiv(a, b):
    return (a + b - 1) // b


def _round_up(n, m):
    return ((n + m - 1) // m) * m


def _leaky_relu(x, slope):
    return jnp.where(x > 0, x, slope * x)


def _dimension_semantics():
    """CORE_PARALLEL on v7x (2 TCs/chip), plain 'parallel' elsewhere."""
    try:
        kind = jax.devices()[0].device_kind.lower()
    except Exception:
        kind = ""
    if ("v7" in kind or "7x" in kind) and hasattr(pltpu, "CORE_PARALLEL"):
        return (pltpu.CORE_PARALLEL,)
    return ("parallel",)


def discriminator_kernel(
    x_ref,            # (TB, 784) f32   raw input tile (cast to bf16 in-kernel)
    w1_ref, b1_ref,   # (784, 512) bf16, (1, 512) f32
    w2_ref, b2_ref,   # (512, 256) bf16 (BN-folded), (1, 256) f32 (BN-folded)
    w3_ref, b3_ref,   # (1, 256) f32, (1, 1) f32
    out_ref,          # (1, TB) f32  -- lane-dense output slab
):
    # Linear(784, 512) + LeakyReLU(0.2)        [Dropout = identity at eval]
    x = x_ref[...].astype(jnp.bfloat16)        # f32->bf16 VPU pass, hidden under MXU
    h1 = jnp.dot(x, w1_ref[...],
                 preferred_element_type=jnp.float32) + b1_ref[...]
    h1 = _leaky_relu(h1, LEAKY_SLOPE)

    # Linear(512, 256) with eval-mode BatchNorm folded in, then LeakyReLU(0.2)
    h2 = jnp.dot(h1.astype(jnp.bfloat16), w2_ref[...],
                 preferred_element_type=jnp.float32) + b2_ref[...]
    h2 = _leaky_relu(h2, LEAKY_SLOPE)

    # Linear(256, 1) as VPU multiply + lane reduction, then a tiny (TB,1)->(1,TB)
    # transpose (XLU is idle here) so the store is lane-dense.
    col = jnp.sum(h2 * w3_ref[...], axis=-1, keepdims=True)     # (TB, 1)
    out_ref[...] = jax.nn.sigmoid(col.T + b3_ref[...])          # (1, TB)


def pack_params(params):
    """Fold eval-mode BatchNorm into Linear-2; cast matmul weights to bf16."""
    scale = params["gamma"] * jax.lax.rsqrt(params["running_var"] + BN_EPS)   # (1, 256)
    w1b = params["w1"].astype(jnp.bfloat16)
    w2f = (params["w2"] * scale).astype(jnp.bfloat16)
    b2f = (params["b2"] - params["running_mean"]) * scale + params["beta"]
    w3row = params["w3"].reshape(1, H2).astype(jnp.float32)
    b3 = params["b3"].reshape(1, 1).astype(jnp.float32)
    return w1b, params["b1"].astype(jnp.float32), w2f, b2f, w3row, b3


def discriminator_forward(x, params, *, tile_b=1024):
    """x: (B, 784) float32. Returns (B, 1) float32 scores in (0, 1)."""
    B = x.shape[0]
    assert x.shape[1] == D_IN, x.shape
    w1b, b1, w2f, b2f, w3row, b3 = pack_params(params)

    # Adaptive batch tile: as big as tile_b allows, rounded to the f32 sublane
    # multiple (8) so B_pad overshoots B by < 8 rows.
    num_tiles_target = _cdiv(B, tile_b)
    TB = _round_up(_cdiv(B, num_tiles_target), 8)
    num_tiles = _cdiv(B, TB)
    B_pad = num_tiles * TB

    # Only materialize a padded copy when the batch is not tile-divisible
    # (at most 7 extra zero rows thanks to the adaptive TB above).
    x_in = x if B_pad == B else jnp.pad(x, ((0, B_pad - B), (0, 0)))

    def const(shape):
        # Weight blocks: same block every grid step -> stay VMEM-resident.
        return pl.BlockSpec(shape, lambda i: (0,) * len(shape))

    flops = 2 * B_pad * (D_IN * H1 + H1 * H2 + H2)
    bytes_accessed = (x_in.size * 4 + w1b.size * 2 + w2f.size * 2
                      + (b1.size + b2f.size + w3row.size + b3.size) * 4
                      + B_pad * 4)

    out = pl.pallas_call(
        discriminator_kernel,
        out_shape=jax.ShapeDtypeStruct((num_tiles, TB), jnp.float32),
        grid=(num_tiles,),
        in_specs=[
            pl.BlockSpec((TB, D_IN), lambda i: (i, 0)),    # x tile (pipelined)
            const((D_IN, H1)), const((1, H1)),             # w1, b1
            const((H1, H2)), const((1, H2)),               # w2', b2' (BN folded)
            const((1, H2)), const((1, 1)),                 # w3 row, b3
        ],
        out_specs=pl.BlockSpec((1, TB), lambda i: (i, 0)),  # lane-dense slab
        compiler_params=pltpu.CompilerParams(
            dimension_semantics=_dimension_semantics(),
            vmem_limit_bytes=32 * 1024 * 1024),
        cost_estimate=pl.CostEstimate(
            flops=flops, transcendentals=B_pad, bytes_accessed=bytes_accessed),
    )(x_in, w1b, b1, w2f, b2f, w3row, b3)

    # (num_tiles, TB) -> (B_pad,) row-major keeps global row order i*TB + j.
    return out.reshape(-1)[:B].reshape(B, 1)


def init_params(key):
    """Deterministic init matching nn.Linear / nn.BatchNorm1d shapes."""
    ks = jax.random.split(key, 6)

    def linear(kw, kb, fan_in, fan_out):
        bound = 1.0 / jnp.sqrt(fan_in)
        w = jax.random.uniform(kw, (fan_in, fan_out), jnp.float32, -bound, bound)
        b = jax.random.uniform(kb, (1, fan_out), jnp.float32, -bound, bound)
        return w, b

    w1, b1 = linear(ks[0], ks[1], D_IN, H1)
    w2, b2 = linear(ks[2], ks[3], H1, H2)
    w3, b3 = linear(ks[4], ks[5], H2, 1)
    return {
        "w1": w1, "b1": b1,
        "w2": w2, "b2": b2,
        "gamma": jnp.ones((1, H2), jnp.float32),
        "beta": jnp.zeros((1, H2), jnp.float32),
        "running_mean": jnp.zeros((1, H2), jnp.float32),
        "running_var": jnp.ones((1, H2), jnp.float32),
        "w3": w3, "b3": b3,
    }


def reference_forward_f32(x, p):
    """Original full-f32 eval-mode forward (the PyTorch semantics)."""
    h1 = x @ p["w1"] + p["b1"]
    h1 = jnp.where(h1 > 0, h1, LEAKY_SLOPE * h1)
    h2 = h1 @ p["w2"] + p["b2"]
    h2 = (h2 - p["running_mean"]) * jax.lax.rsqrt(p["running_var"] + BN_EPS) \
         * p["gamma"] + p["beta"]
    h2 = jnp.where(h2 > 0, h2, LEAKY_SLOPE * h2)
    return jax.nn.sigmoid(h2 @ p["w3"] + p["b3"])


def reference_forward_packed(x, packed):
    """Plain-JAX reference using the exact bf16/BN-folded params the kernel sees."""
    w1b, b1, w2f, b2f, w3row, b3 = packed
    h1 = jnp.dot(x.astype(jnp.bfloat16), w1b,
                 preferred_element_type=jnp.float32) + b1
    h1 = jnp.where(h1 > 0, h1, LEAKY_SLOPE * h1)
    h2 = jnp.dot(h1.astype(jnp.bfloat16), w2f,
                 preferred_element_type=jnp.float32) + b2f
    h2 = jnp.where(h2 > 0, h2, LEAKY_SLOPE * h2)
    logits = jnp.sum(h2 * w3row, axis=-1, keepdims=True) + b3
    return jax.nn.sigmoid(logits)


if __name__ == "__main__":
    key = jax.random.PRNGKey(0)
    k_x, k_p = jax.random.split(key)
    params = init_params(k_p)
    packed = pack_params(params)

    # Small, tile-divisible batch (single grid step).
    B = 8
    x = jax.random.normal(k_x, (B, D_IN), jnp.float32)   # flattened 28x28 images
    out = jax.block_until_ready(discriminator_forward(x, params))
    ref_bf16 = reference_forward_packed(x, packed)
    ref_f32 = reference_forward_f32(x, params)
    assert out.shape == (B, 1), out.shape
    # Tight check vs a reference using the same bf16/BN-folded weights.
    assert jnp.allclose(out, ref_bf16, atol=1e-3, rtol=1e-3), (out, ref_bf16)
    # Looser sanity check vs the full-f32 PyTorch-equivalent math.
    assert jnp.allclose(out, ref_f32, atol=3e-2, rtol=3e-2), (out, ref_f32)

    # Ragged batch over multiple grid steps: validates the lane-dense output's
    # reshape/slice row ordering and the batch-pad path.
    B2 = 20
    x2 = jax.random.normal(jax.random.PRNGKey(1), (B2, D_IN), jnp.float32)
    out2 = jax.block_until_ready(discriminator_forward(x2, params, tile_b=8))
    ref2 = reference_forward_packed(x2, packed)
    assert out2.shape == (B2, 1), out2.shape
    assert jnp.allclose(out2, ref2, atol=1e-3, rtol=1e-3), (out2, ref2)

    print("KERNEL_OK")
</pallas_src>

<mosaic_0001>
module attributes {stable_mosaic.version = 11 : i64} {
  func.func @discriminator_kernel(%arg0: i32, %arg1: memref<8x784xf32, #tpu.memory_space<vmem>>, %arg2: memref<784x512xbf16, #tpu.memory_space<vmem>>, %arg3: memref<1x512xf32, #tpu.memory_space<vmem>>, %arg4: memref<512x256xbf16, #tpu.memory_space<vmem>>, %arg5: memref<1x256xf32, #tpu.memory_space<vmem>>, %arg6: memref<1x256xf32, #tpu.memory_space<vmem>>, %arg7: memref<1x1xf32, #tpu.memory_space<vmem>>, %arg8: memref<1x8xf32, #tpu.memory_space<vmem>>) attributes {dimension_semantics = [#tpu.dimension_semantics<parallel>], iteration_bounds = array<i64: 1>, scalar_prefetch = 0 : i64, scratch_operands = 0 : i64, tpu.core_type = #tpu.core_type<tc>, window_params = [{transform_indices = @transform_0, window_bounds = array<i64: 8, 784>}, {pipeline_mode = #tpu.pipeline_mode<synchronous>, transform_indices = @transform_1, window_bounds = array<i64: 784, 512>}, {pipeline_mode = #tpu.pipeline_mode<synchronous>, transform_indices = @transform_2, window_bounds = array<i64: 1, 512>}, {pipeline_mode = #tpu.pipeline_mode<synchronous>, transform_indices = @transform_3, window_bounds = array<i64: 512, 256>}, {pipeline_mode = #tpu.pipeline_mode<synchronous>, transform_indices = @transform_4, window_bounds = array<i64: 1, 256>}, {pipeline_mode = #tpu.pipeline_mode<synchronous>, transform_indices = @transform_5, window_bounds = array<i64: 1, 256>}, {pipeline_mode = #tpu.pipeline_mode<synchronous>, transform_indices = @transform_6, window_bounds = array<i64: 1, 1>}, {transform_indices = @transform_7, window_bounds = array<i64: 1, 8>}]} {
    %c0 = arith.constant 0 : index
    %c0_0 = arith.constant 0 : index
    %0 = vector.load %arg1[%c0, %c0_0] : memref<8x784xf32, #tpu.memory_space<vmem>>, vector<8x784xf32>
    %1 = arith.truncf %0 : vector<8x784xf32> to vector<8x784xbf16>
    %c0_1 = arith.constant 0 : index
    %c0_2 = arith.constant 0 : index
    %2 = vector.load %arg2[%c0_1, %c0_2] : memref<784x512xbf16, #tpu.memory_space<vmem>>, vector<784x512xbf16>
    %cst = arith.constant dense<0.000000e+00> : vector<8x512xf32>
    %3 = tpu.matmul %1, %2, %cst {dimension_numbers = #tpu.dot_dimension_numbers<[1], [0], [0], [1], [0, 0, 1, 1], [], []>} : vector<8x784xbf16>, vector<784x512xbf16>, vector<8x512xf32> -> vector<8x512xf32>
    %c0_3 = arith.constant 0 : index
    %c0_4 = arith.constant 0 : index
    %4 = vector.load %arg3[%c0_3, %c0_4] : memref<1x512xf32, #tpu.memory_space<vmem>>, vector<1x512xf32>
    %5 = vector.broadcast %4 : vector<1x512xf32> to vector<8x512xf32>
    %6 = arith.addf %3, %5 : vector<8x512xf32>
    %cst_5 = arith.constant 0.000000e+00 : f32
    %7 = vector.broadcast %cst_5 : f32 to vector<8x512xf32>
    %8 = arith.cmpf ogt, %6, %7 : vector<8x512xf32>
    %cst_6 = arith.constant 2.000000e-01 : f32
    %9 = vector.broadcast %cst_6 : f32 to vector<8x512xf32>
    %10 = arith.mulf %9, %6 : vector<8x512xf32>
    %11 = arith.select %8, %6, %10 : vector<8x512xi1>, vector<8x512xf32>
    %12 = arith.truncf %11 : vector<8x512xf32> to vector<8x512xbf16>
    %c0_7 = arith.constant 0 : index
    %c0_8 = arith.constant 0 : index
    %13 = vector.load %arg4[%c0_7, %c0_8] : memref<512x256xbf16, #tpu.memory_space<vmem>>, vector<512x256xbf16>
    %cst_9 = arith.constant dense<0.000000e+00> : vector<8x256xf32>
    %14 = tpu.matmul %12, %13, %cst_9 {dimension_numbers = #tpu.dot_dimension_numbers<[1], [0], [0], [1], [0, 0, 1, 1], [], []>} : vector<8x512xbf16>, vector<512x256xbf16>, vector<8x256xf32> -> vector<8x256xf32>
    %c0_10 = arith.constant 0 : index
    %c0_11 = arith.constant 0 : index
    %15 = vector.load %arg5[%c0_10, %c0_11] : memref<1x256xf32, #tpu.memory_space<vmem>>, vector<1x256xf32>
    %16 = vector.broadcast %15 : vector<1x256xf32> to vector<8x256xf32>
    %17 = arith.addf %14, %16 : vector<8x256xf32>
    %cst_12 = arith.constant 0.000000e+00 : f32
    %18 = vector.broadcast %cst_12 : f32 to vector<8x256xf32>
    %19 = arith.cmpf ogt, %17, %18 : vector<8x256xf32>
    %cst_13 = arith.constant 2.000000e-01 : f32
    %20 = vector.broadcast %cst_13 : f32 to vector<8x256xf32>
    %21 = arith.mulf %20, %17 : vector<8x256xf32>
    %22 = arith.select %19, %17, %21 : vector<8x256xi1>, vector<8x256xf32>
    %c0_14 = arith.constant 0 : index
    %c0_15 = arith.constant 0 : index
    %23 = vector.load %arg6[%c0_14, %c0_15] : memref<1x256xf32, #tpu.memory_space<vmem>>, vector<1x256xf32>
    %24 = vector.broadcast %23 : vector<1x256xf32> to vector<8x256xf32>
    %25 = arith.mulf %22, %24 : vector<8x256xf32>
    %cst_16 = arith.constant dense<0.000000e+00> : vector<8xf32>
    %26 = vector.multi_reduction <add>, %25, %cst_16 [1] : vector<8x256xf32> to vector<8xf32>
    %27 = vector.shape_cast %26 : vector<8xf32> to vector<8x1xf32>
    %28 = tpu.transpose %27, [1, 0] : vector<8x1xf32> -> vector<1x8xf32>
    %c0_17 = arith.constant 0 : index
    %c0_18 = arith.constant 0 : index
    %29 = vector.load %arg7[%c0_17, %c0_18] : memref<1x1xf32, #tpu.memory_space<vmem>>, vector<1x1xf32>
    %30 = vector.broadcast %29 : vector<1x1xf32> to vector<1x8xf32>
    %31 = arith.addf %28, %30 : vector<1x8xf32>
    %32 = arith.negf %31 : vector<1x8xf32>
    %33 = math.exp %32 : vector<1x8xf32>
    %cst_19 = arith.constant 1.000000e+00 : f32
    %34 = vector.broadcast %cst_19 : f32 to vector<1x8xf32>
    %35 = arith.addf %34, %33 : vector<1x8xf32>
    %36 = arith.divf %34, %35 : vector<1x8xf32>
    %c0_20 = arith.constant 0 : index
    %c0_21 = arith.constant 0 : index
    %37 = vector.load %arg8[%c0_20, %c0_21] : memref<1x8xf32, #tpu.memory_space<vmem>>, vector<1x8xf32>
    tpu.vector_store %arg8[%c0_20, %c0_21], %36 {strides = array<i32>} : memref<1x8xf32, #tpu.memory_space<vmem>>, vector<1x8xf32>,
    return
  }
  func.func @transform_0(%arg0: i32) -> (i32, i32) {
    %c0_i32 = arith.constant 0 : i32
    %c0_i32_0 = arith.constant 0 : i32
    return %arg0, %c0_i32 : i32, i32
  }
  func.func @transform_1(%arg0: i32) -> (i32, i32) {
    %c0_i32 = arith.constant 0 : i32
    %c0_i32_0 = arith.constant 0 : i32
    %c0_i32_1 = arith.constant 0 : i32
    return %c0_i32, %c0_i32_0 : i32, i32
  }
  func.func @transform_2(%arg0: i32) -> (i32, i32) {
    %c0_i32 = arith.constant 0 : i32
    %c0_i32_0 = arith.constant 0 : i32
    %c0_i32_1 = arith.constant 0 : i32
    return %c0_i32, %c0_i32_0 : i32, i32
  }
  func.func @transform_3(%arg0: i32) -> (i32, i32) {
    %c0_i32 = arith.constant 0 : i32
    %c0_i32_0 = arith.constant 0 : i32
    %c0_i32_1 = arith.constant 0 : i32
    return %c0_i32, %c0_i32_0 : i32, i32
  }
  func.func @transform_4(%arg0: i32) -> (i32, i32) {
    %c0_i32 = arith.constant 0 : i32
    %c0_i32_0 = arith.constant 0 : i32
    %c0_i32_1 = arith.constant 0 : i32
    return %c0_i32, %c0_i32_0 : i32, i32
  }
  func.func @transform_5(%arg0: i32) -> (i32, i32) {
    %c0_i32 = arith.constant 0 : i32
    %c0_i32_0 = arith.constant 0 : i32
    %c0_i32_1 = arith.constant 0 : i32
    return %c0_i32, %c0_i32_0 : i32, i32
  }
  func.func @transform_6(%arg0: i32) -> (i32, i32) {
    %c0_i32 = arith.constant 0 : i32
    %c0_i32_0 = arith.constant 0 : i32
    %c0_i32_1 = arith.constant 0 : i32
    return %c0_i32, %c0_i32_0 : i32, i32
  }
  func.func @transform_7(%arg0: i32) -> (i32, i32) {
    %c0_i32 = arith.constant 0 : i32
    %c0_i32_0 = arith.constant 0 : i32
    return %arg0, %c0_i32 : i32, i32
  }
}

</mosaic_0001>

<llo_original>
// kernel: tpu_custom_call.1
$region0: #{tpu_custom_call.1}
  #allocation0 [shape = 'u32[]', space=smem, size = 0x4, offset = 0x4, fixed_abs, tag = 'smem constant byte address 0x4 - core index']
  #allocation1 [shape = 'u32[72,128]{1,0:T(1,128)}', space=vmem, size = 0x9000, scoped, tag = 'internal scratch']
  #allocation2 [shape = 'f32[1,1]{1,0:T(1,128)S(1)}', space=vmem, size = 0x200, scoped, tag = 'scoped memory for tpu_custom_call.1']
  %s0 = inlined_call_operand.hbm [shape: f32[8,784], index: 0, kind: input, shape index: {}]
  %s1 = inlined_call_operand.hbm [shape: bf16[784,512], index: 1, kind: input, shape index: {}]
  %s2 = inlined_call_operand.hbm [shape: f32[1,512], index: 2, kind: input, shape index: {}]
  %s3 = inlined_call_operand.hbm [shape: bf16[512,256], index: 3, kind: input, shape index: {}]
  %s4 = inlined_call_operand.vmem [shape: f32[1,256], index: 4, kind: input, shape index: {}]
  %s5 = inlined_call_operand.vmem [shape: f32[1,256], index: 5, kind: input, shape index: {}]
  %s6 = inlined_call_operand.<no memory space> [shape: f32[1,1], index: 6, kind: input, shape index: {}]
  %s7 = inlined_call_operand.hbm [shape: f32[1,8], index: 7, kind: output, shape index: {}]
  %s8 = sld [smem:[#allocation0]]
  $region54: #{tpu_custom_call.1} parent=0
    _
  %s10 = ssub.s32 1, %s8
  %s11 = scalar_select 0, %s10, %s8
  %v12 = vstv %s6
  %13 = vst [vmem:[#allocation2] sm:$0x1] %v12
  $region1: #{tpu_custom_call.1} parent=0
    #allocation3 [shape = 'u8[28672]{0}', space=vmem, size = 0x7000, scoped, tag = 'input window, operand 0, single buffered']
    #allocation4 [shape = 's32[1]{0}', space=sflag, size = 0x4, scoped, tag = 'scoped memory for tpu_custom_call.1']
    #allocation5 [shape = 's32[1]{0}', space=sflag, size = 0x4, scoped, tag = 'scoped memory for tpu_custom_call.1']
    #allocation6 [shape = 'u8[802816]{0}', space=vmem, size = 0xc4000, scoped, tag = 'input window, operand 1, single buffered']
    #allocation7 [shape = 's32[1]{0}', space=sflag, size = 0x4, scoped, tag = 'scoped memory for tpu_custom_call.1']
    #allocation8 [shape = 'u8[2048]{0}', space=vmem, size = 0x800, scoped, tag = 'input window, operand 2, single buffered']
    #allocation9 [shape = 'u8[262144]{0}', space=vmem, size = 0x40000, scoped, tag = 'input window, operand 3, single buffered']
    #allocation10 [shape = 's32[1]{0}', space=sflag, size = 0x4, scoped, tag = 'scoped memory for tpu_custom_call.1']
    #allocation11 [shape = 'u8[512]{0}', space=vmem, size = 0x400, scoped, tag = 'output window, operand 0, single buffered']
    %14 = vsyncpa [#allocation4], 0
    %15 = vsyncpa [#allocation7], 0
    %16 = vsyncpa [#allocation10], 0
    %17 = vsyncpa [#allocation5], 0
    // Predicated region
    $region2: #{tpu_custom_call.1} parent=1 // pred_check
      _
    $region3: #{tpu_custom_call.1} parent=1 // pred_check_branch
      %19 = sbr.rel (0) target = $region5
    $region4: #{tpu_custom_call.1} parent=1 // pred_region
      %21 = vsyncadd [#allocation4], 0
      %s23 = sshll.u32 %s0, 4
      %s24 = int_to_ptr.hbm [resolvable:$true] %s23
      %s25 = sshll.u32 [#allocation3], 4
      %s26 = int_to_ptr.vmem [resolvable:$true] %s25
      %28 = dma.hbm_to_vmem [thread:$0]  %s24, 896, %s26, [#allocation4]
    $region5: #{tpu_custom_call.1} parent=1 // pred_fallthru
      _
    // Predicated region
    $region6: #{tpu_custom_call.1} parent=1 // pred_check
      _
    $region7: #{tpu_custom_call.1} parent=1 // pred_check_branch
      %30 = sbr.rel (0) target = $region9
    $region8: #{tpu_custom_call.1} parent=1 // pred_region
      %32 = vsyncadd [#allocation7], 0
      %s33 = sshll.u32 %s1, 4
      %s34 = int_to_ptr.hbm [resolvable:$true] %s33
      %s35 = sshll.u32 [#allocation6], 4
      %s36 = int_to_ptr.vmem [resolvable:$true] %s35
      %41 = dma.hbm_to_vmem [thread:$0]  %s34, 25088, %s36, [#allocation7], 256, 256, 16
    $region9: #{tpu_custom_call.1} parent=1 // pred_fallthru
      _
    // Predicated region
    $region10: #{tpu_custom_call.1} parent=1 // pred_check
      _
    $region11: #{tpu_custom_call.1} parent=1 // pred_check_branch
      %43 = sbr.rel (0) target = $region13
    $region12: #{tpu_custom_call.1} parent=1 // pred_region
      %45 = vsyncadd [#allocation7], 0
      %s47 = sshll.u32 %s2, 4
      %s48 = int_to_ptr.hbm [resolvable:$true] %s47
      %s49 = sshll.u32 [#allocation8], 4
      %s50 = int_to_ptr.vmem [resolvable:$true] %s49
      %52 = dma.hbm_to_vmem [thread:$0]  %s48, 64, %s50, [#allocation7]
    $region13: #{tpu_custom_call.1} parent=1 // pred_fallthru
      _
    // Predicated region
    $region14: #{tpu_custom_call.1} parent=1 // pred_check
      _
    $region15: #{tpu_custom_call.1} parent=1 // pred_check_branch
      %54 = sbr.rel (0) target = $region17
    $region16: #{tpu_custom_call.1} parent=1 // pred_region
      %56 = vsyncadd [#allocation10], 0
      %s57 = sshll.u32 %s3, 4
      %s58 = int_to_ptr.hbm [resolvable:$true] %s57
      %s59 = sshll.u32 [#allocation9], 4
      %s60 = int_to_ptr.vmem [resolvable:$true] %s59
      %65 = dma.hbm_to_vmem [thread:$0]  %s58, 8192, %s60, [#allocation10], 128, 128, 8
    $region17: #{tpu_custom_call.1} parent=1 // pred_fallthru
      _
    // Predicated region
    $region18: #{tpu_custom_call.1} parent=1 // pred_check
      _
    $region19: #{tpu_custom_call.1} parent=1 // pred_check_branch
      %67 = sbr.rel (0) target = $region21
    $region20: #{tpu_custom_call.1} parent=1 // pred_region
      _
    $region21: #{tpu_custom_call.1} parent=1 // pred_fallthru
      _
    // Predicated region
    $region22: #{tpu_custom_call.1} parent=1 // pred_check
      _
    $region23: #{tpu_custom_call.1} parent=1 // pred_check_branch
      %69 = sbr.rel (0) target = $region25
    $region24: #{tpu_custom_call.1} parent=1 // pred_region
      _
    $region25: #{tpu_custom_call.1} parent=1 // pred_fallthru
      _
    // Predicated region
    $region26: #{tpu_custom_call.1} parent=1 // pred_check
      _
    $region27: #{tpu_custom_call.1} parent=1 // pred_check_branch
      %71 = sbr.rel (0) target = $region29
    $region28: #{tpu_custom_call.1} parent=1 // pred_region
      _
    $region29: #{tpu_custom_call.1} parent=1 // pred_fallthru
      _
    // Predicated region
    $region30: #{tpu_custom_call.1} parent=1 // pred_check
      _
    $region31: #{tpu_custom_call.1} parent=1 // pred_check_branch
      %73 = sbr.rel (0) target = $region33
    $region32: #{tpu_custom_call.1} parent=1 // pred_region
      %75 = dma.done [#allocation4], 896
    $region33: #{tpu_custom_call.1} parent=1 // pred_fallthru
      _
    // Predicated region
    $region34: #{tpu_custom_call.1} parent=1 // pred_check
      _
    $region35: #{tpu_custom_call.1} parent=1 // pred_check_branch
      %77 = sbr.rel (0) target = $region37
    $region36: #{tpu_custom_call.1} parent=1 // pred_region
      %79 = dma.done [#allocation7], 25088
    $region37: #{tpu_custom_call.1} parent=1 // pred_fallthru
      _
    // Predicated region
    $region38: #{tpu_custom_call.1} parent=1 // pred_check
      _
    $region39: #{tpu_custom_call.1} parent=1 // pred_check_branch
      %81 = sbr.rel (0) target = $region41
    $region40: #{tpu_custom_call.1} parent=1 // pred_region
      %83 = dma.done [#allocation7], 64
    $region41: #{tpu_custom_call.1} parent=1 // pred_fallthru
      _
    // Predicated region
    $region42: #{tpu_custom_call.1} parent=1 // pred_check
      _
    $region43: #{tpu_custom_call.1} parent=1 // pred_check_branch
      %85 = sbr.rel (0) target = $region45
    $region44: #{tpu_custom_call.1} parent=1 // pred_region
      %87 = dma.done [#allocation10], 8192
    $region45: #{tpu_custom_call.1} parent=1 // pred_fallthru
      _
    %v89 = vld [vmem:[#allocation3] sm:$0xff]
    %v90 = vld [vmem:[#allocation3 + $0x8] sm:$0xff]
    %v91 = vld [vmem:[#allocation3 + $0x10] sm:$0xff]
    %v92 = vld [vmem:[#allocation3 + $0x18] sm:$0xff]
    %v93 = vld [vmem:[#allocation3 + $0x20] sm:$0xff]
    %v94 = vld [vmem:[#allocation3 + $0x28] sm:$0xff]
    %v95 = vld [vmem:[#allocation3 + $0x30] sm:$0xff]
    %v96 = vpack.c.bf16 %v89, %v89
    %v97 = vpack.c.bf16 %v90, %v90
    %v98 = vpack.c.bf16 %v91, %v91
    %v99 = vpack.c.bf16 %v92, %v92
    %v100 = vpack.c.bf16 %v93, %v93
    %v101 = vpack.c.bf16 %v94, %v94
    %v102 = vpack.c.bf16 %v95, %v95
    %v103 = vld [vmem:[#allocation6] sm:$0xff]
    %v104 = vld [vmem:[#allocation6 + $0x8] sm:$0xff]
    %v105 = vld [vmem:[#allocation6 + $0x10] sm:$0xff]
    %v106 = vld [vmem:[#allocation6 + $0x18] sm:$0xff]
    %v107 = vld [vmem:[#allocation6 + $0x20] sm:$0xff]
    %v108 = vld [vmem:[#allocation6 + $0x28] sm:$0xff]
    %v109 = vld [vmem:[#allocation6 + $0x30] sm:$0xff]
    %v110 = vld [vmem:[#allocation6 + $0x38] sm:$0xff]
    %v111 = vld [vmem:[#allocation6 + $0x40] sm:$0xff]
    %v112 = vld [vmem:[#allocation6 + $0x48] sm:$0xff]
    %v113 = vld [vmem:[#allocation6 + $0x50] sm:$0xff]
    %v114 = vld [vmem:[#allocation6 + $0x58] sm:$0xff]
    %v115 = vld [vmem:[#allocation6 + $0x60] sm:$0xff]
    %v116 = vld [vmem:[#allocation6 + $0x68] sm:$0xff]
    %v117 = vld [vmem:[#allocation6 + $0x70] sm:$0xff]
    %v118 = vld [vmem:[#allocation6 + $0x78] sm:$0xff]
    %v119 = vld [vmem:[#allocation6 + $0x80] sm:$0xff]
    %v120 = vld [vmem:[#allocation6 + $0x88] sm:$0xff]
    %v121 = vld [vmem:[#allocation6 + $0x90] sm:$0xff]
    %v122 = vld [vmem:[#allocation6 + $0x98] sm:$0xff]
    %v123 = vld [vmem:[#allocation6 + $0xa0] sm:$0xff]
    %v124 = vld [vmem:[#allocation6 + $0xa8] sm:$0xff]
    %v125 = vld [vmem:[#allocation6 + $0xb0] sm:$0xff]
    %v126 = vld [vmem:[#allocation6 + $0xb8] sm:$0xff]
    %v127 = vld [vmem:[#allocation6 + $0xc0] sm:$0xff]
    %v128 = vld [vmem:[#allocation6 + $0xc8] sm:$0xff]
    %v129 = vld [vmem:[#allocation6 + $0xd0] sm:$0xff]
    %v130 = vld [vmem:[#allocation6 + $0xd8] sm:$0xff]
    %v131 = vld [vmem:[#allocation6 + $0xe0] sm:$0xff]
    %v132 = vld [vmem:[#allocation6 + $0xe8] sm:$0xff]
    %v133 = vld [vmem:[#allocation6 + $0xf0] sm:$0xff]
    %v134 = vld [vmem:[#allocation6 + $0xf8] sm:$0xff]
    %v135 = vld [vmem:[#allocation6 + $0x100] sm:$0xff]
    %v136 = vld [vmem:[#allocation6 + $0x108] sm:$0xff]
    %v137 = vld [vmem:[#allocation6 + $0x110] sm:$0xff]
    %v138 = vld [vmem:[#allocation6 + $0x118] sm:$0xff]
    %v139 = vld [vmem:[#allocation6 + $0x120] sm:$0xff]
    %v140 = vld [vmem:[#allocation6 + $0x128] sm:$0xff]
    %v141 = vld [vmem:[#allocation6 + $0x130] sm:$0xff]
    %v142 = vld [vmem:[#allocation6 + $0x138] sm:$0xff]
    %v143 = vld [vmem:[#allocation6 + $0x140] sm:$0xff]
    %v144 = vld [vmem:[#allocation6 + $0x148] sm:$0xff]
    %v145 = vld [vmem:[#allocation6 + $0x150] sm:$0xff]
    %v146 = vld [vmem:[#allocation6 + $0x158] sm:$0xff]
    %v147 = vld [vmem:[#allocation6 + $0x160] sm:$0xff]
    %v148 = vld [vmem:[#allocation6 + $0x168] sm:$0xff]
    %v149 = vld [vmem:[#allocation6 + $0x170] sm:$0xff]
    %v150 = vld [vmem:[#allocation6 + $0x178] sm:$0xff]
    %v151 = vld [vmem:[#allocation6 + $0x180] sm:$0xff]
    %v152 = vld [vmem:[#allocation6 + $0x188] sm:$0xff]
    %v153 = vld [vmem:[#allocation6 + $0x190] sm:$0xff]
    %v154 = vld [vmem:[#allocation6 + $0x198] sm:$0xff]
    %v155 = vld [vmem:[#allocation6 + $0x1a0] sm:$0xff]
    %v156 = vld [vmem:[#allocation6 + $0x1a8] sm:$0xff]
    %v157 = vld [vmem:[#allocation6 + $0x1b0] sm:$0xff]
    %v158 = vld [vmem:[#allocation6 + $0x1b8] sm:$0xff]
    %v159 = vld [vmem:[#allocation6 + $0x1c0] sm:$0xff]
    %v160 = vld [vmem:[#allocation6 + $0x1c8] sm:$0xff]
    %v161 = vld [vmem:[#allocation6 + $0x1d0] sm:$0xff]
    %v162 = vld [vmem:[#allocation6 + $0x1d8] sm:$0xff]
    %v163 = vld [vmem:[#allocation6 + $0x1e0] sm:$0xff]
    %v164 = vld [vmem:[#allocation6 + $0x1e8] sm:$0xff]
    %v165 = vld [vmem:[#allocation6 + $0x1f0] sm:$0xff]
    %v166 = vld [vmem:[#allocation6 + $0x1f8] sm:$0xff]
    %v167 = vld [vmem:[#allocation6 + $0x200] sm:$0xff]
    %v168 = vld [vmem:[#allocation6 + $0x208] sm:$0xff]
    %v169 = vld [vmem:[#allocation6 + $0x210] sm:$0xff]
    %v170 = vld [vmem:[#allocation6 + $0x218] sm:$0xff]
    %v171 = vld [vmem:[#allocation6 + $0x220] sm:$0xff]
    %v172 = vld [vmem:[#allocation6 + $0x228] sm:$0xff]
    %v173 = vld [vmem:[#allocation6 + $0x230] sm:$0xff]
    %v174 = vld [vmem:[#allocation6 + $0x238] sm:$0xff]
    %v175 = vld [vmem:[#allocation6 + $0x240] sm:$0xff]
    %v176 = vld [vmem:[#allocation6 + $0x248] sm:$0xff]
    %v177 = vld [vmem:[#allocation6 + $0x250] sm:$0xff]
    %v178 = vld [vmem:[#allocation6 + $0x258] sm:$0xff]
    %v179 = vld [vmem:[#allocation6 + $0x260] sm:$0xff]
    %v180 = vld [vmem:[#allocation6 + $0x268] sm:$0xff]
    %v181 = vld [vmem:[#allocation6 + $0x270] sm:$0xff]
    %v182 = vld [vmem:[#allocation6 + $0x278] sm:$0xff]
    %v183 = vld [vmem:[#allocation6 + $0x280] sm:$0xff]
    %v184 = vld [vmem:[#allocation6 + $0x288] sm:$0xff]
    %v185 = vld [vmem:[#allocation6 + $0x290] sm:$0xff]
    %v186 = vld [vmem:[#allocation6 + $0x298] sm:$0xff]
    %v187 = vld [vmem:[#allocation6 + $0x2a0] sm:$0xff]
    %v188 = vld [vmem:[#allocation6 + $0x2a8] sm:$0xff]
    %v189 = vld [vmem:[#allocation6 + $0x2b0] sm:$0xff]
    %v190 = vld [vmem:[#allocation6 + $0x2b8] sm:$0xff]
    %v191 = vld [vmem:[#allocation6 + $0x2c0] sm:$0xff]
    %v192 = vld [vmem:[#allocation6 + $0x2c8] sm:$0xff]
    %v193 = vld [vmem:[#allocation6 + $0x2d0] sm:$0xff]
    %v194 = vld [vmem:[#allocation6 + $0x2d8] sm:$0xff]
    %v195 = vld [vmem:[#allocation6 + $0x2e0] sm:$0xff]
    %v196 = vld [vmem:[#allocation6 + $0x2e8] sm:$0xff]
    %v197 = vld [vmem:[#allocation6 + $0x2f0] sm:$0xff]
    %v198 = vld [vmem:[#allocation6 + $0x2f8] sm:$0xff]
    %v199 = vld [vmem:[#allocation6 + $0x300] sm:$0xff]
    %v200 = vld [vmem:[#allocation6 + $0x308] sm:$0xff]
    %v201 = vld [vmem:[#allocation6 + $0x310] sm:$0xff]
    %v202 = vld [vmem:[#allocation6 + $0x318] sm:$0xff]
    %v203 = vld [vmem:[#allocation6 + $0x320] sm:$0xff]
    %v204 = vld [vmem:[#allocation6 + $0x328] sm:$0xff]
    %v205 = vld [vmem:[#allocation6 + $0x330] sm:$0xff]
    %v206 = vld [vmem:[#allocation6 + $0x338] sm:$0xff]
    %v207 = vld [vmem:[#allocation6 + $0x340] sm:$0xff]
    %v208 = vld [vmem:[#allocation6 + $0x348] sm:$0xff]
    %v209 = vld [vmem:[#allocation6 + $0x350] sm:$0xff]
    %v210 = vld [vmem:[#allocation6 + $0x358] sm:$0xff]
    %v211 = vld [vmem:[#allocation6 + $0x360] sm:$0xff]
    %v212 = vld [vmem:[#allocation6 + $0x368] sm:$0xff]
    %v213 = vld [vmem:[#allocation6 + $0x370] sm:$0xff]
    %v214 = vld [vmem:[#allocation6 + $0x378] sm:$0xff]
    %v215 = vld [vmem:[#allocation6 + $0x380] sm:$0xff]
    %v216 = vld [vmem:[#allocation6 + $0x388] sm:$0xff]
    %v217 = vld [vmem:[#allocation6 + $0x390] sm:$0xff]
    %v218 = vld [vmem:[#allocation6 + $0x398] sm:$0xff]
    %v219 = vld [vmem:[#allocation6 + $0x3a0] sm:$0xff]
    %v220 = vld [vmem:[#allocation6 + $0x3a8] sm:$0xff]
    %v221 = vld [vmem:[#allocation6 + $0x3b0] sm:$0xff]
    %v222 = vld [vmem:[#allocation6 + $0x3b8] sm:$0xff]
    %v223 = vld [vmem:[#allocation6 + $0x3c0] sm:$0xff]
    %v224 = vld [vmem:[#allocation6 + $0x3c8] sm:$0xff]
    %v225 = vld [vmem:[#allocation6 + $0x3d0] sm:$0xff]
    %v226 = vld [vmem:[#allocation6 + $0x3d8] sm:$0xff]
    %v227 = vld [vmem:[#allocation6 + $0x3e0] sm:$0xff]
    %v228 = vld [vmem:[#allocation6 + $0x3e8] sm:$0xff]
    %v229 = vld [vmem:[#allocation6 + $0x3f0] sm:$0xff]
    %v230 = vld [vmem:[#allocation6 + $0x3f8] sm:$0xff]
    %v231 = vld [vmem:[#allocation6 + $0x400] sm:$0xff]
    %v232 = vld [vmem:[#allocation6 + $0x408] sm:$0xff]
    %v233 = vld [vmem:[#allocation6 + $0x410] sm:$0xff]
    %v234 = vld [vmem:[#allocation6 + $0x418] sm:$0xff]
    %v235 = vld [vmem:[#allocation6 + $0x420] sm:$0xff]
    %v236 = vld [vmem:[#allocation6 + $0x428] sm:$0xff]
    %v237 = vld [vmem:[#allocation6 + $0x430] sm:$0xff]
    %v238 = vld [vmem:[#allocation6 + $0x438] sm:$0xff]
    %v239 = vld [vmem:[#allocation6 + $0x440] sm:$0xff]
    %v240 = vld [vmem:[#allocation6 + $0x448] sm:$0xff]
    %v241 = vld [vmem:[#allocation6 + $0x450] sm:$0xff]
    %v242 = vld [vmem:[#allocation6 + $0x458] sm:$0xff]
    %v243 = vld [vmem:[#allocation6 + $0x460] sm:$0xff]
    %v244 = vld [vmem:[#allocation6 + $0x468] sm:$0xff]
    %v245 = vld [vmem:[#allocation6 + $0x470] sm:$0xff]
    %v246 = vld [vmem:[#allocation6 + $0x478] sm:$0xff]
    %v247 = vld [vmem:[#allocation6 + $0x480] sm:$0xff]
    %v248 = vld [vmem:[#allocation6 + $0x488] sm:$0xff]
    %v249 = vld [vmem:[#allocation6 + $0x490] sm:$0xff]
    %v250 = vld [vmem:[#allocation6 + $0x498] sm:$0xff]
    %v251 = vld [vmem:[#allocation6 + $0x4a0] sm:$0xff]
    %v252 = vld [vmem:[#allocation6 + $0x4a8] sm:$0xff]
    %v253 = vld [vmem:[#allocation6 + $0x4b0] sm:$0xff]
    %v254 = vld [vmem:[#allocation6 + $0x4b8] sm:$0xff]
    %v255 = vld [vmem:[#allocation6 + $0x4c0] sm:$0xff]
    %v256 = vld [vmem:[#allocation6 + $0x4c8] sm:$0xff]
    %v257 = vld [vmem:[#allocation6 + $0x4d0] sm:$0xff]
    %v258 = vld [vmem:[#allocation6 + $0x4d8] sm:$0xff]
    %v259 = vld [vmem:[#allocation6 + $0x4e0] sm:$0xff]
    %v260 = vld [vmem:[#allocation6 + $0x4e8] sm:$0xff]
    %v261 = vld [vmem:[#allocation6 + $0x4f0] sm:$0xff]
    %v262 = vld [vmem:[#allocation6 + $0x4f8] sm:$0xff]
    %v263 = vld [vmem:[#allocation6 + $0x500] sm:$0xff]
    %v264 = vld [vmem:[#allocation6 + $0x508] sm:$0xff]
    %v265 = vld [vmem:[#allocation6 + $0x510] sm:$0xff]
    %v266 = vld [vmem:[#allocation6 + $0x518] sm:$0xff]
    %v267 = vld [vmem:[#allocation6 + $0x520] sm:$0xff]
    %v268 = vld [vmem:[#allocation6 + $0x528] sm:$0xff]
    %v269 = vld [vmem:[#allocation6 + $0x530] sm:$0xff]
    %v270 = vld [vmem:[#allocation6 + $0x538] sm:$0xff]
    %v271 = vld [vmem:[#allocation6 + $0x540] sm:$0xff]
    %v272 = vld [vmem:[#allocation6 + $0x548] sm:$0xff]
    %v273 = vld [vmem:[#allocation6 + $0x550] sm:$0xff]
    %v274 = vld [vmem:[#allocation6 + $0x558] sm:$0xff]
    %v275 = vld [vmem:[#allocation6 + $0x560] sm:$0xff]
    %v276 = vld [vmem:[#allocation6 + $0x568] sm:$0xff]
    %v277 = vld [vmem:[#allocation6 + $0x570] sm:$0xff]
    %v278 = vld [vmem:[#allocation6 + $0x578] sm:$0xff]
    %v279 = vld [vmem:[#allocation6 + $0x580] sm:$0xff]
    %v280 = vld [vmem:[#allocation6 + $0x588] sm:$0xff]
    %v281 = vld [vmem:[#allocation6 + $0x590] sm:$0xff]
    %v282 = vld [vmem:[#allocation6 + $0x598] sm:$0xff]
    %v283 = vld [vmem:[#allocation6 + $0x5a0] sm:$0xff]
    %v284 = vld [vmem:[#allocation6 + $0x5a8] sm:$0xff]
    %v285 = vld [vmem:[#allocation6 + $0x5b0] sm:$0xff]
    %v286 = vld [vmem:[#allocation6 + $0x5b8] sm:$0xff]
    %v287 = vld [vmem:[#allocation6 + $0x5c0] sm:$0xff]
    %v288 = vld [vmem:[#allocation6 + $0x5c8] sm:$0xff]
    %v289 = vld [vmem:[#allocation6 + $0x5d0] sm:$0xff]
    %v290 = vld [vmem:[#allocation6 + $0x5d8] sm:$0xff]
    %v291 = vld [vmem:[#allocation6 + $0x5e0] sm:$0xff]
    %v292 = vld [vmem:[#allocation6 + $0x5e8] sm:$0xff]
    %v293 = vld [vmem:[#allocation6 + $0x5f0] sm:$0xff]
    %v294 = vld [vmem:[#allocation6 + $0x5f8] sm:$0xff]
    %v295 = vld [vmem:[#allocation6 + $0x600] sm:$0xff]
    %v296 = vld [vmem:[#allocation6 + $0x608] sm:$0xff]
    %v297 = vld [vmem:[#allocation6 + $0x610] sm:$0xff]
    %v298 = vld [vmem:[#allocation6 + $0x618] sm:$0xff]
    %v299 = vld [vmem:[#allocation8] sm:$0xf]
    %v301 = vperm.slane %v299, 0
    %v302 = vperm.slane %v299, 1
    %v303 = vperm.slane %v299, 2
    %v304 = vperm.slane %v299, 3
    %v505 = vunpack.c.l.b16 %v103
    %v506 = vunpack.c.h.b16 %v103
    %v507 = vunpack.c.l.b16 %v104
    %v508 = vunpack.c.h.b16 %v104
    %v509 = vunpack.c.l.b16 %v105
    %v510 = vunpack.c.h.b16 %v105
    %v511 = vunpack.c.l.b16 %v106
    %v512 = vunpack.c.h.b16 %v106
    %v513 = vunpack.c.l.b16 %v107
    %v514 = vunpack.c.h.b16 %v107
    %v515 = vunpack.c.l.b16 %v108
    %v516 = vunpack.c.h.b16 %v108
    %v517 = vunpack.c.l.b16 %v109
    %v518 = vunpack.c.h.b16 %v109
    %v519 = vunpack.c.l.b16 %v110
    %v520 = vunpack.c.h.b16 %v110
    %v521 = vunpack.c.l.b16 %v111
    %v522 = vunpack.c.h.b16 %v111
    %v523 = vunpack.c.l.b16 %v112
    %v524 = vunpack.c.h.b16 %v112
    %v525 = vunpack.c.l.b16 %v113
    %v526 = vunpack.c.h.b16 %v113
    %v527 = vunpack.c.l.b16 %v114
    %v528 = vunpack.c.h.b16 %v114
    %v529 = vunpack.c.l.b16 %v115
    %v530 = vunpack.c.h.b16 %v115
    %v531 = vunpack.c.l.b16 %v116
    %v532 = vunpack.c.h.b16 %v116
    %v533 = vunpack.c.l.b16 %v117
    %v534 = vunpack.c.h.b16 %v117
    %v535 = vunpack.c.l.b16 %v118
    %v536 = vunpack.c.h.b16 %v118
    %v537 = vunpack.c.l.b16 %v119
    %v538 = vunpack.c.h.b16 %v119
    %v539 = vunpack.c.l.b16 %v120
    %v540 = vunpack.c.h.b16 %v120
    %v541 = vunpack.c.l.b16 %v121
    %v542 = vunpack.c.h.b16 %v121
    %v543 = vunpack.c.l.b16 %v122
    %v544 = vunpack.c.h.b16 %v122
    %v545 = vunpack.c.l.b16 %v123
    %v546 = vunpack.c.h.b16 %v123
    %v547 = vunpack.c.l.b16 %v124
    %v548 = vunpack.c.h.b16 %v124
    %v549 = vunpack.c.l.b16 %v125
    %v550 = vunpack.c.h.b16 %v125
    %v551 = vunpack.c.l.b16 %v126
    %v552 = vunpack.c.h.b16 %v126
    %v553 = vunpack.c.l.b16 %v127
    %v554 = vunpack.c.h.b16 %v127
    %v555 = vunpack.c.l.b16 %v128
    %v556 = vunpack.c.h.b16 %v128
    %v557 = vunpack.c.l.b16 %v129
    %v558 = vunpack.c.h.b16 %v129
    %v559 = vunpack.c.l.b16 %v130
    %v560 = vunpack.c.h.b16 %v130
    %v561 = vunpack.c.l.b16 %v131
    %v562 = vunpack.c.h.b16 %v131
    %v563 = vunpack.c.l.b16 %v132
    %v564 = vunpack.c.h.b16 %v132
    %v565 = vunpack.c.l.b16 %v133
    %v566 = vunpack.c.h.b16 %v133
    %v567 = vunpack.c.l.b16 %v134
    %v568 = vunpack.c.h.b16 %v134
    %v569 = vunpack.c.l.b16 %v135
    %v570 = vunpack.c.h.b16 %v135
    %v571 = vunpack.c.l.b16 %v136
    %v572 = vunpack.c.h.b16 %v136
    %v573 = vunpack.c.l.b16 %v137
    %v574 = vunpack.c.h.b16 %v137
    %v575 = vunpack.c.l.b16 %v138
    %v576 = vunpack.c.h.b16 %v138
    %v577 = vunpack.c.l.b16 %v139
    %v578 = vunpack.c.h.b16 %v139
    %v579 = vunpack.c.l.b16 %v140
    %v580 = vunpack.c.h.b16 %v140
    %v581 = vunpack.c.l.b16 %v141
    %v582 = vunpack.c.h.b16 %v141
    %v583 = vunpack.c.l.b16 %v142
    %v584 = vunpack.c.h.b16 %v142
    %v585 = vunpack.c.l.b16 %v143
    %v586 = vunpack.c.h.b16 %v143
    %v587 = vunpack.c.l.b16 %v144
    %v588 = vunpack.c.h.b16 %v144
    %v589 = vunpack.c.l.b16 %v145
    %v590 = vunpack.c.h.b16 %v145
    %v591 = vunpack.c.l.b16 %v146
    %v592 = vunpack.c.h.b16 %v146
    %v593 = vunpack.c.l.b16 %v147
    %v594 = vunpack.c.h.b16 %v147
    %v595 = vunpack.c.l.b16 %v148
    %v596 = vunpack.c.h.b16 %v148
    %v597 = vunpack.c.l.b16 %v149
    %v598 = vunpack.c.h.b16 %v149
    %v599 = vunpack.c.l.b16 %v150
    %v600 = vunpack.c.h.b16 %v150
    %v601 = vunpack.c.l.b16 %v151
    %v602 = vunpack.c.h.b16 %v151
    %v603 = vunpack.c.l.b16 %v152
    %v604 = vunpack.c.h.b16 %v152
    %v605 = vunpack.c.l.b16 %v153
    %v606 = vunpack.c.h.b16 %v153
    %v607 = vunpack.c.l.b16 %v154
    %v608 = vunpack.c.h.b16 %v154
    %v609 = vunpack.c.l.b16 %v155
    %v610 = vunpack.c.h.b16 %v155
    %v611 = vunpack.c.l.b16 %v156
    %v612 = vunpack.c.h.b16 %v156
    %v613 = vunpack.c.l.b16 %v157
    %v614 = vunpack.c.h.b16 %v157
    %v615 = vunpack.c.l.b16 %v158
    %v616 = vunpack.c.h.b16 %v158
    %v617 = vunpack.c.l.b16 %v159
    %v618 = vunpack.c.h.b16 %v159
    %v619 = vunpack.c.l.b16 %v160
    %v620 = vunpack.c.h.b16 %v160
    %v621 = vunpack.c.l.b16 %v161
    %v622 = vunpack.c.h.b16 %v161
    %v623 = vunpack.c.l.b16 %v162
    %v624 = vunpack.c.h.b16 %v162
    %v625 = vunpack.c.l.b16 %v163
    %v626 = vunpack.c.h.b16 %v163
    %v627 = vunpack.c.l.b16 %v164
    %v628 = vunpack.c.h.b16 %v164
    %v629 = vunpack.c.l.b16 %v165
    %v630 = vunpack.c.h.b16 %v165
    %v631 = vunpack.c.l.b16 %v166
    %v632 = vunpack.c.h.b16 %v166
    %v633 = vunpack.c.l.b16 %v167
    %v634 = vunpack.c.h.b16 %v167
    %v635 = vunpack.c.l.b16 %v168
    %v636 = vunpack.c.h.b16 %v168
    %v637 = vunpack.c.l.b16 %v169
    %v638 = vunpack.c.h.b16 %v169
    %v639 = vunpack.c.l.b16 %v170
    %v640 = vunpack.c.h.b16 %v170
    %v641 = vunpack.c.l.b16 %v171
    %v642 = vunpack.c.h.b16 %v171
    %v643 = vunpack.c.l.b16 %v172
    %v644 = vunpack.c.h.b16 %v172
    %v645 = vunpack.c.l.b16 %v173
    %v646 = vunpack.c.h.b16 %v173
    %v647 = vunpack.c.l.b16 %v174
    %v648 = vunpack.c.h.b16 %v174
    %v649 = vunpack.c.l.b16 %v175
    %v650 = vunpack.c.h.b16 %v175
    %v651 = vunpack.c.l.b16 %v176
    %v652 = vunpack.c.h.b16 %v176
    %v653 = vunpack.c.l.b16 %v177
    %v654 = vunpack.c.h.b16 %v177
    %v655 = vunpack.c.l.b16 %v178
    %v656 = vunpack.c.h.b16 %v178
    %v657 = vunpack.c.l.b16 %v179
    %v658 = vunpack.c.h.b16 %v179
    %v659 = vunpack.c.l.b16 %v180
    %v660 = vunpack.c.h.b16 %v180
    %v661 = vunpack.c.l.b16 %v181
    %v662 = vunpack.c.h.b16 %v181
    %v663 = vunpack.c.l.b16 %v182
    %v664 = vunpack.c.h.b16 %v182
    %v665 = vunpack.c.l.b16 %v183
    %v666 = vunpack.c.h.b16 %v183
    %v667 = vunpack.c.l.b16 %v184
    %v668 = vunpack.c.h.b16 %v184
    %v669 = vunpack.c.l.b16 %v185
    %v670 = vunpack.c.h.b16 %v185
    %v671 = vunpack.c.l.b16 %v186
    %v672 = vunpack.c.h.b16 %v186
    %v673 = vunpack.c.l.b16 %v187
    %v674 = vunpack.c.h.b16 %v187
    %v675 = vunpack.c.l.b16 %v188
    %v676 = vunpack.c.h.b16 %v188
    %v677 = vunpack.c.l.b16 %v189
    %v678 = vunpack.c.h.b16 %v189
    %v679 = vunpack.c.l.b16 %v190
    %v680 = vunpack.c.h.b16 %v190
    %v681 = vunpack.c.l.b16 %v191
    %v682 = vunpack.c.h.b16 %v191
    %v683 = vunpack.c.l.b16 %v192
    %v684 = vunpack.c.h.b16 %v192
    %v685 = vunpack.c.l.b16 %v193
    %v686 = vunpack.c.h.b16 %v193
    %v687 = vunpack.c.l.b16 %v194
    %v688 = vunpack.c.h.b16 %v194
    %v689 = vunpack.c.l.b16 %v195
    %v690 = vunpack.c.h.b16 %v195
    %v691 = vunpack.c.l.b16 %v196
    %v692 = vunpack.c.h.b16 %v196
    %v693 = vunpack.c.l.b16 %v197
    %v694 = vunpack.c.h.b16 %v197
    %v695 = vunpack.c.l.b16 %v198
    %v696 = vunpack.c.h.b16 %v198
    %v697 = vunpack.c.l.b16 %v199
    %v698 = vunpack.c.h.b16 %v199
    %v699 = vunpack.c.l.b16 %v200
    %v700 = vunpack.c.h.b16 %v200
    %v701 = vunpack.c.l.b16 %v201
    %v702 = vunpack.c.h.b16 %v201
    %v703 = vunpack.c.l.b16 %v202
    %v704 = vunpack.c.h.b16 %v202
    %v705 = vunpack.c.l.b16 %v203
    %v706 = vunpack.c.h.b16 %v203
    %v707 = vunpack.c.l.b16 %v204
    %v708 = vunpack.c.h.b16 %v204
    %v709 = vunpack.c.l.b16 %v205
    %v710 = vunpack.c.h.b16 %v205
    %v711 = vunpack.c.l.b16 %v206
    %v712 = vunpack.c.h.b16 %v206
    %v713 = vunpack.c.l.b16 %v207
    %v714 = vunpack.c.h.b16 %v207
    %v715 = vunpack.c.l.b16 %v208
    %v716 = vunpack.c.h.b16 %v208
    %v717 = vunpack.c.l.b16 %v209
    %v718 = vunpack.c.h.b16 %v209
    %v719 = vunpack.c.l.b16 %v210
    %v720 = vunpack.c.h.b16 %v210
    %v721 = vunpack.c.l.b16 %v211
    %v722 = vunpack.c.h.b16 %v211
    %v723 = vunpack.c.l.b16 %v212
    %v724 = vunpack.c.h.b16 %v212
    %v725 = vunpack.c.l.b16 %v213
    %v726 = vunpack.c.h.b16 %v213
    %v727 = vunpack.c.l.b16 %v214
    %v728 = vunpack.c.h.b16 %v214
    %v729 = vunpack.c.l.b16 %v215
    %v730 = vunpack.c.h.b16 %v215
    %v731 = vunpack.c.l.b16 %v216
    %v732 = vunpack.c.h.b16 %v216
    %v733 = vunpack.c.l.b16 %v217
    %v734 = vunpack.c.h.b16 %v217
    %v735 = vunpack.c.l.b16 %v218
    %v736 = vunpack.c.h.b16 %v218
    %v737 = vunpack.c.l.b16 %v219
    %v738 = vunpack.c.h.b16 %v219
    %v739 = vunpack.c.l.b16 %v220
    %v740 = vunpack.c.h.b16 %v220
    %v741 = vunpack.c.l.b16 %v221
    %v742 = vunpack.c.h.b16 %v221
    %v743 = vunpack.c.l.b16 %v222
    %v744 = vunpack.c.h.b16 %v222
    %v745 = vunpack.c.l.b16 %v223
    %v746 = vunpack.c.h.b16 %v223
    %v747 = vunpack.c.l.b16 %v224
    %v748 = vunpack.c.h.b16 %v224
    %v749 = vunpack.c.l.b16 %v225
    %v750 = vunpack.c.h.b16 %v225
    %v751 = vunpack.c.l.b16 %v226
    %v752 = vunpack.c.h.b16 %v226
    %v753 = vunpack.c.l.b16 %v227
    %v754 = vunpack.c.h.b16 %v227
    %v755 = vunpack.c.l.b16 %v228
    %v756 = vunpack.c.h.b16 %v228
    %v757 = vunpack.c.l.b16 %v229
    %v758 = vunpack.c.h.b16 %v229
    %v759 = vunpack.c.l.b16 %v230
    %v760 = vunpack.c.h.b16 %v230
    %v761 = vunpack.c.l.b16 %v231
    %v762 = vunpack.c.h.b16 %v231
    %v763 = vunpack.c.l.b16 %v232
    %v764 = vunpack.c.h.b16 %v232
    %v765 = vunpack.c.l.b16 %v233
    %v766 = vunpack.c.h.b16 %v233
    %v767 = vunpack.c.l.b16 %v234
    %v768 = vunpack.c.h.b16 %v234
    %v769 = vunpack.c.l.b16 %v235
    %v770 = vunpack.c.h.b16 %v235
    %v771 = vunpack.c.l.b16 %v236
    %v772 = vunpack.c.h.b16 %v236
    %v773 = vunpack.c.l.b16 %v237
    %v774 = vunpack.c.h.b16 %v237
    %v775 = vunpack.c.l.b16 %v238
    %v776 = vunpack.c.h.b16 %v238
    %v777 = vunpack.c.l.b16 %v239
    %v778 = vunpack.c.h.b16 %v239
    %v779 = vunpack.c.l.b16 %v240
    %v780 = vunpack.c.h.b16 %v240
    %v781 = vunpack.c.l.b16 %v241
    %v782 = vunpack.c.h.b16 %v241
    %v783 = vunpack.c.l.b16 %v242
    %v784 = vunpack.c.h.b16 %v242
    %v785 = vunpack.c.l.b16 %v243
    %v786 = vunpack.c.h.b16 %v243
    %v787 = vunpack.c.l.b16 %v244
    %v788 = vunpack.c.h.b16 %v244
    %v789 = vunpack.c.l.b16 %v245
    %v790 = vunpack.c.h.b16 %v245
    %v791 = vunpack.c.l.b16 %v246
    %v792 = vunpack.c.h.b16 %v246
    %v793 = vunpack.c.l.b16 %v247
    %v794 = vunpack.c.h.b16 %v247
    %v795 = vunpack.c.l.b16 %v248
    %v796 = vunpack.c.h.b16 %v248
    %v797 = vunpack.c.l.b16 %v249
    %v798 = vunpack.c.h.b16 %v249
    %v799 = vunpack.c.l.b16 %v250
    %v800 = vunpack.c.h.b16 %v250
    %v801 = vunpack.c.l.b16 %v251
    %v802 = vunpack.c.h.b16 %v251
    %v803 = vunpack.c.l.b16 %v252
    %v804 = vunpack.c.h.b16 %v252
    %v805 = vunpack.c.l.b16 %v253
    %v806 = vunpack.c.h.b16 %v253
    %v807 = vunpack.c.l.b16 %v254
    %v808 = vunpack.c.h.b16 %v254
    %v809 = vunpack.c.l.b16 %v255
    %v810 = vunpack.c.h.b16 %v255
    %v811 = vunpack.c.l.b16 %v256
    %v812 = vunpack.c.h.b16 %v256
    %v813 = vunpack.c.l.b16 %v257
    %v814 = vunpack.c.h.b16 %v257
    %v815 = vunpack.c.l.b16 %v258
    %v816 = vunpack.c.h.b16 %v258
    %v817 = vunpack.c.l.b16 %v259
    %v818 = vunpack.c.h.b16 %v259
    %v819 = vunpack.c.l.b16 %v260
    %v820 = vunpack.c.h.b16 %v260
    %v821 = vunpack.c.l.b16 %v261
    %v822 = vunpack.c.h.b16 %v261
    %v823 = vunpack.c.l.b16 %v262
    %v824 = vunpack.c.h.b16 %v262
    %v825 = vunpack.c.l.b16 %v263
    %v826 = vunpack.c.h.b16 %v263
    %v827 = vunpack.c.l.b16 %v264
    %v828 = vunpack.c.h.b16 %v264
    %v829 = vunpack.c.l.b16 %v265
    %v830 = vunpack.c.h.b16 %v265
    %v831 = vunpack.c.l.b16 %v266
    %v832 = vunpack.c.h.b16 %v266
    %v833 = vunpack.c.l.b16 %v267
    %v834 = vunpack.c.h.b16 %v267
    %v835 = vunpack.c.l.b16 %v268
    %v836 = vunpack.c.h.b16 %v268
    %v837 = vunpack.c.l.b16 %v269
    %v838 = vunpack.c.h.b16 %v269
    %v839 = vunpack.c.l.b16 %v270
    %v840 = vunpack.c.h.b16 %v270
    %v841 = vunpack.c.l.b16 %v271
    %v842 = vunpack.c.h.b16 %v271
    %v843 = vunpack.c.l.b16 %v272
    %v844 = vunpack.c.h.b16 %v272
    %v845 = vunpack.c.l.b16 %v273
    %v846 = vunpack.c.h.b16 %v273
    %v847 = vunpack.c.l.b16 %v274
    %v848 = vunpack.c.h.b16 %v274
    %v849 = vunpack.c.l.b16 %v275
    %v850 = vunpack.c.h.b16 %v275
    %v851 = vunpack.c.l.b16 %v276
    %v852 = vunpack.c.h.b16 %v276
    %v853 = vunpack.c.l.b16 %v277
    %v854 = vunpack.c.h.b16 %v277
    %v855 = vunpack.c.l.b16 %v278
    %v856 = vunpack.c.h.b16 %v278
    %v857 = vunpack.c.l.b16 %v279
    %v858 = vunpack.c.h.b16 %v279
    %v859 = vunpack.c.l.b16 %v280
    %v860 = vunpack.c.h.b16 %v280
    %v861 = vunpack.c.l.b16 %v281
    %v862 = vunpack.c.h.b16 %v281
    %v863 = vunpack.c.l.b16 %v282
    %v864 = vunpack.c.h.b16 %v282
    %v865 = vunpack.c.l.b16 %v283
    %v866 = vunpack.c.h.b16 %v283
    %v867 = vunpack.c.l.b16 %v284
    %v868 = vunpack.c.h.b16 %v284
    %v869 = vunpack.c.l.b16 %v285
    %v870 = vunpack.c.h.b16 %v285
    %v871 = vunpack.c.l.b16 %v286
    %v872 = vunpack.c.h.b16 %v286
    %v873 = vunpack.c.l.b16 %v287
    %v874 = vunpack.c.h.b16 %v287
    %v875 = vunpack.c.l.b16 %v288
    %v876 = vunpack.c.h.b16 %v288
    %v877 = vunpack.c.l.b16 %v289
    %v878 = vunpack.c.h.b16 %v289
    %v879 = vunpack.c.l.b16 %v290
    %v880 = vunpack.c.h.b16 %v290
    %v881 = vunpack.c.l.b16 %v291
    %v882 = vunpack.c.h.b16 %v291
    %v883 = vunpack.c.l.b16 %v292
    %v884 = vunpack.c.h.b16 %v292
    %v885 = vunpack.c.l.b16 %v293
    %v886 = vunpack.c.h.b16 %v293
    %v887 = vunpack.c.l.b16 %v294
    %v888 = vunpack.c.h.b16 %v294
    %v889 = vunpack.c.l.b16 %v295
    %v890 = vunpack.c.h.b16 %v295
    %v891 = vunpack.c.l.b16 %v296
    %v892 = vunpack.c.h.b16 %v296
    %v893 = vunpack.c.l.b16 %v297
    %v894 = vunpack.c.h.b16 %v297
    %v895 = vunpack.c.l.b16 %v298
    %v896 = vunpack.c.h.b16 %v298
    %v897 = vpack.c.b16 %v509, %v505
    %v898 = vpack.c.b16 %v510, %v506
    %v899 = vpack.c.b16 %v511, %v507
    %v900 = vpack.c.b16 %v512, %v508
    %v901 = vpack.c.b16 %v517, %v513
    %v902 = vpack.c.b16 %v518, %v514
    %v903 = vpack.c.b16 %v519, %v515
    %v904 = vpack.c.b16 %v520, %v516
    %v905 = vpack.c.b16 %v525, %v521
    %v906 = vpack.c.b16 %v526, %v522
    %v907 = vpack.c.b16 %v527, %v523
    %v908 = vpack.c.b16 %v528, %v524
    %v909 = vpack.c.b16 %v533, %v529
    %v910 = vpack.c.b16 %v534, %v530
    %v911 = vpack.c.b16 %v535, %v531
    %v912 = vpack.c.b16 %v536, %v532
    %v913 = vpack.c.b16 %v541, %v537
    %v914 = vpack.c.b16 %v542, %v538
    %v915 = vpack.c.b16 %v543, %v539
    %v916 = vpack.c.b16 %v544, %v540
    %v917 = vpack.c.b16 %v549, %v545
    %v918 = vpack.c.b16 %v550, %v546
    %v919 = vpack.c.b16 %v551, %v547
    %v920 = vpack.c.b16 %v552, %v548
    %v921 = vpack.c.b16 %v557, %v553
    %v922 = vpack.c.b16 %v558, %v554
    %v923 = vpack.c.b16 %v559, %v555
    %v924 = vpack.c.b16 %v560, %v556
    %v925 = vpack.c.b16 %v565, %v561
    %v926 = vpack.c.b16 %v566, %v562
    %v927 = vpack.c.b16 %v567, %v563
    %v928 = vpack.c.b16 %v568, %v564
    %v929 = vpack.c.b16 %v573, %v569
    %v930 = vpack.c.b16 %v574, %v570
    %v931 = vpack.c.b16 %v575, %v571
    %v932 = vpack.c.b16 %v576, %v572
    %v933 = vpack.c.b16 %v581, %v577
    %v934 = vpack.c.b16 %v582, %v578
    %v935 = vpack.c.b16 %v583, %v579
    %v936 = vpack.c.b16 %v584, %v580
    %v937 = vpack.c.b16 %v589, %v585
    %v938 = vpack.c.b16 %v590, %v586
    %v939 = vpack.c.b16 %v591, %v587
    %v940 = vpack.c.b16 %v592, %v588
    %v941 = vpack.c.b16 %v597, %v593
    %v942 = vpack.c.b16 %v598, %v594
    %v943 = vpack.c.b16 %v599, %v595
    %v944 = vpack.c.b16 %v600, %v596
    %v945 = vpack.c.b16 %v605, %v601
    %v946 = vpack.c.b16 %v606, %v602
    %v947 = vpack.c.b16 %v607, %v603
    %v948 = vpack.c.b16 %v608, %v604
    %v949 = vpack.c.b16 %v613, %v609
    %v950 = vpack.c.b16 %v614, %v610
    %v951 = vpack.c.b16 %v615, %v611
    %v952 = vpack.c.b16 %v616, %v612
    %v953 = vpack.c.b16 %v621, %v617
    %v954 = vpack.c.b16 %v622, %v618
    %v955 = vpack.c.b16 %v623, %v619
    %v956 = vpack.c.b16 %v624, %v620
    %v957 = vpack.c.b16 %v629, %v625
    %v958 = vpack.c.b16 %v630, %v626
    %v959 = vpack.c.b16 %v631, %v627
    %v960 = vpack.c.b16 %v632, %v628
    %v961 = vpack.c.b16 %v637, %v633
    %v962 = vpack.c.b16 %v638, %v634
    %v963 = vpack.c.b16 %v639, %v635
    %v964 = vpack.c.b16 %v640, %v636
    %v965 = vpack.c.b16 %v645, %v641
    %v966 = vpack.c.b16 %v646, %v642
    %v967 = vpack.c.b16 %v647, %v643
    %v968 = vpack.c.b16 %v648, %v644
    %v969 = vpack.c.b16 %v653, %v649
    %v970 = vpack.c.b16 %v654, %v650
    %v971 = vpack.c.b16 %v655, %v651
    %v972 = vpack.c.b16 %v656, %v652
    %v973 = vpack.c.b16 %v661, %v657
    %v974 = vpack.c.b16 %v662, %v658
    %v975 = vpack.c.b16 %v663, %v659
    %v976 = vpack.c.b16 %v664, %v660
    %v977 = vpack.c.b16 %v669, %v665
    %v978 = vpack.c.b16 %v670, %v666
    %v979 = vpack.c.b16 %v671, %v667
    %v980 = vpack.c.b16 %v672, %v668
    %v981 = vpack.c.b16 %v677, %v673
    %v982 = vpack.c.b16 %v678, %v674
    %v983 = vpack.c.b16 %v679, %v675
    %v984 = vpack.c.b16 %v680, %v676
    %v985 = vpack.c.b16 %v685, %v681
    %v986 = vpack.c.b16 %v686, %v682
    %v987 = vpack.c.b16 %v687, %v683
    %v988 = vpack.c.b16 %v688, %v684
    %v989 = vpack.c.b16 %v693, %v689
    %v990 = vpack.c.b16 %v694, %v690
    %v991 = vpack.c.b16 %v695, %v691
    %v992 = vpack.c.b16 %v696, %v692
    %v993 = vpack.c.b16 %v701, %v697
    %v994 = vpack.c.b16 %v702, %v698
    %v995 = vpack.c.b16 %v703, %v699
    %v996 = vpack.c.b16 %v704, %v700
    %v997 = vpack.c.b16 %v709, %v705
    %v998 = vpack.c.b16 %v710, %v706
    %v999 = vpack.c.b16 %v711, %v707
    %v1000 = vpack.c.b16 %v712, %v708
    %v1001 = vpack.c.b16 %v717, %v713
    %v1002 = vpack.c.b16 %v718, %v714
    %v1003 = vpack.c.b16 %v719, %v715
    %v1004 = vpack.c.b16 %v720, %v716
    %v1005 = vpack.c.b16 %v725, %v721
    %v1006 = vpack.c.b16 %v726, %v722
    %v1007 = vpack.c.b16 %v727, %v723
    %v1008 = vpack.c.b16 %v728, %v724
    %v1009 = vpack.c.b16 %v733, %v729
    %v1010 = vpack.c.b16 %v734, %v730
    %v1011 = vpack.c.b16 %v735, %v731
    %v1012 = vpack.c.b16 %v736, %v732
    %v1013 = vpack.c.b16 %v741, %v737
    %v1014 = vpack.c.b16 %v742, %v738
    %v1015 = vpack.c.b16 %v743, %v739
    %v1016 = vpack.c.b16 %v744, %v740
    %v1017 = vpack.c.b16 %v749, %v745
    %v1018 = vpack.c.b16 %v750, %v746
    %v1019 = vpack.c.b16 %v751, %v747
    %v1020 = vpack.c.b16 %v752, %v748
    %v1021 = vpack.c.b16 %v757, %v753
    %v1022 = vpack.c.b16 %v758, %v754
    %v1023 = vpack.c.b16 %v759, %v755
    %v1024 = vpack.c.b16 %v760, %v756
    %v1025 = vpack.c.b16 %v765, %v761
    %v1026 = vpack.c.b16 %v766, %v762
    %v1027 = vpack.c.b16 %v767, %v763
    %v1028 = vpack.c.b16 %v768, %v764
    %v1029 = vpack.c.b16 %v773, %v769
    %v1030 = vpack.c.b16 %v774, %v770
    %v1031 = vpack.c.b16 %v775, %v771
    %v1032 = vpack.c.b16 %v776, %v772
    %v1033 = vpack.c.b16 %v781, %v777
    %v1034 = vpack.c.b16 %v782, %v778
    %v1035 = vpack.c.b16 %v783, %v779
    %v1036 = vpack.c.b16 %v784, %v780
    %v1037 = vpack.c.b16 %v789, %v785
    %v1038 = vpack.c.b16 %v790, %v786
    %v1039 = vpack.c.b16 %v791, %v787
    %v1040 = vpack.c.b16 %v792, %v788
    %v1041 = vpack.c.b16 %v797, %v793
    %v1042 = vpack.c.b16 %v798, %v794
    %v1043 = vpack.c.b16 %v799, %v795
    %v1044 = vpack.c.b16 %v800, %v796
    %v1045 = vpack.c.b16 %v805, %v801
    %v1046 = vpack.c.b16 %v806, %v802
    %v1047 = vpack.c.b16 %v807, %v803
    %v1048 = vpack.c.b16 %v808, %v804
    %v1049 = vpack.c.b16 %v813, %v809
    %v1050 = vpack.c.b16 %v814, %v810
    %v1051 = vpack.c.b16 %v815, %v811
    %v1052 = vpack.c.b16 %v816, %v812
    %v1053 = vpack.c.b16 %v821, %v817
    %v1054 = vpack.c.b16 %v822, %v818
    %v1055 = vpack.c.b16 %v823, %v819
    %v1056 = vpack.c.b16 %v824, %v820
    %v1057 = vpack.c.b16 %v829, %v825
    %v1058 = vpack.c.b16 %v830, %v826
    %v1059 = vpack.c.b16 %v831, %v827
    %v1060 = vpack.c.b16 %v832, %v828
    %v1061 = vpack.c.b16 %v837, %v833
    %v1062 = vpack.c.b16 %v838, %v834
    %v1063 = vpack.c.b16 %v839, %v835
    %v1064 = vpack.c.b16 %v840, %v836
    %v1065 = vpack.c.b16 %v845, %v841
    %v1066 = vpack.c.b16 %v846, %v842
    %v1067 = vpack.c.b16 %v847, %v843
    %v1068 = vpack.c.b16 %v848, %v844
    %v1069 = vpack.c.b16 %v853, %v849
    %v1070 = vpack.c.b16 %v854, %v850
    %v1071 = vpack.c.b16 %v855, %v851
    %v1072 = vpack.c.b16 %v856, %v852
    %v1073 = vpack.c.b16 %v861, %v857
    %v1074 = vpack.c.b16 %v862, %v858
    %v1075 = vpack.c.b16 %v863, %v859
    %v1076 = vpack.c.b16 %v864, %v860
    %v1077 = vpack.c.b16 %v869, %v865
    %v1078 = vpack.c.b16 %v870, %v866
    %v1079 = vpack.c.b16 %v871, %v867
    %v1080 = vpack.c.b16 %v872, %v868
    %v1081 = vpack.c.b16 %v877, %v873
    %v1082 = vpack.c.b16 %v878, %v874
    %v1083 = vpack.c.b16 %v879, %v875
    %v1084 = vpack.c.b16 %v880, %v876
    %v1085 = vpack.c.b16 %v885, %v881
    %v1086 = vpack.c.b16 %v886, %v882
    %v1087 = vpack.c.b16 %v887, %v883
    %v1088 = vpack.c.b16 %v888, %v884
    %v1089 = vpack.c.b16 %v893, %v889
    %v1090 = vpack.c.b16 %v894, %v890
    %v1091 = vpack.c.b16 %v895, %v891
    %v1092 = vpack.c.b16 %v896, %v892
    %vm1289 = vcmask 130048
    %v1291 = vsel %vm1289, %v102, 0
    %1293 = vmatpush.bf16.msra.mxu0 %v925
    %1294 = vmatpush.bf16.msra.mxu0 %v921
    %1295 = vmatpush.bf16.msra.mxu0 %v917
    %1296 = vmatpush.bf16.msra.mxu0 %v913
    %1297 = vmatpush.bf16.msra.mxu0 %v909
    %1298 = vmatpush.bf16.msra.mxu0 %v905
    %1299 = vmatpush.bf16.msra.mxu0 %v901
    %1300 = vmatpush.bf16.msra.mxu0 %v897
    %1301 = vmatmul.bf16.gmra.mxu0 %v96
    %v1302 = vpop.f32.mrf.mxu0
    %v1303 = vadd.f32 %v301, %v1302
    %v1304 = vpop.f32.mrf.mxu0
    %1305 = vdwg.mxu0
    %1306 = vmatpush.bf16.msra.mxu0 %v957
    %1307 = vmatpush.bf16.msra.mxu0 %v953
    %1308 = vmatpush.bf16.msra.mxu0 %v949
    %1309 = vmatpush.bf16.msra.mxu0 %v945
    %1310 = vmatpush.bf16.msra.mxu0 %v941
    %1311 = vmatpush.bf16.msra.mxu0 %v937
    %1312 = vmatpush.bf16.msra.mxu0 %v933
    %1313 = vmatpush.bf16.msra.mxu0 %v929
    %1314 = vmatmul.bf16.gmra.mxu0 %v97
    %v1315 = vpop.f32.mrf.mxu0
    %v1316 = vadd.f32 %v1303, %v1315
    %v1317 = vpop.f32.mrf.mxu0
    %1318 = vdwg.mxu0
    %1319 = vmatpush.bf16.msra.mxu0 %v989
    %1320 = vmatpush.bf16.msra.mxu0 %v985
    %1321 = vmatpush.bf16.msra.mxu0 %v981
    %1322 = vmatpush.bf16.msra.mxu0 %v977
    %1323 = vmatpush.bf16.msra.mxu0 %v973
    %1324 = vmatpush.bf16.msra.mxu0 %v969
    %1325 = vmatpush.bf16.msra.mxu0 %v965
    %1326 = vmatpush.bf16.msra.mxu0 %v961
    %1327 = vmatmul.bf16.gmra.mxu0 %v98
    %v1328 = vpop.f32.mrf.mxu0
    %v1329 = vadd.f32 %v1316, %v1328
    %v1330 = vpop.f32.mrf.mxu0
    %1331 = vdwg.mxu0
    %1332 = vmatpush.bf16.msra.mxu0 %v1021
    %1333 = vmatpush.bf16.msra.mxu0 %v1017
    %1334 = vmatpush.bf16.msra.mxu0 %v1013
    %1335 = vmatpush.bf16.msra.mxu0 %v1009
    %1336 = vmatpush.bf16.msra.mxu0 %v1005
    %1337 = vmatpush.bf16.msra.mxu0 %v1001
    %1338 = vmatpush.bf16.msra.mxu0 %v997
    %1339 = vmatpush.bf16.msra.mxu0 %v993
    %1340 = vmatmul.bf16.gmra.mxu0 %v99
    %v1341 = vpop.f32.mrf.mxu0
    %v1342 = vadd.f32 %v1329, %v1341
    %v1343 = vpop.f32.mrf.mxu0
    %1344 = vdwg.mxu0
    %1345 = vmatpush.bf16.msra.mxu0 %v1053
    %1346 = vmatpush.bf16.msra.mxu0 %v1049
    %1347 = vmatpush.bf16.msra.mxu0 %v1045
    %1348 = vmatpush.bf16.msra.mxu0 %v1041
    %1349 = vmatpush.bf16.msra.mxu0 %v1037
    %1350 = vmatpush.bf16.msra.mxu0 %v1033
    %1351 = vmatpush.bf16.msra.mxu0 %v1029
    %1352 = vmatpush.bf16.msra.mxu0 %v1025
    %1353 = vmatmul.bf16.gmra.mxu0 %v100
    %v1354 = vpop.f32.mrf.mxu0
    %v1355 = vadd.f32 %v1342, %v1354
    %v1356 = vpop.f32.mrf.mxu0
    %1357 = vdwg.mxu0
    %1358 = vmatpush.bf16.msra.mxu0 %v1085
    %1359 = vmatpush.bf16.msra.mxu0 %v1081
    %1360 = vmatpush.bf16.msra.mxu0 %v1077
    %1361 = vmatpush.bf16.msra.mxu0 %v1073
    %1362 = vmatpush.bf16.msra.mxu0 %v1069
    %1363 = vmatpush.bf16.msra.mxu0 %v1065
    %1364 = vmatpush.bf16.msra.mxu0 %v1061
    %1365 = vmatpush.bf16.msra.mxu0 %v1057
    %1366 = vmatmul.bf16.gmra.mxu0 %v101
    %v1367 = vpop.f32.mrf.mxu0
    %v1368 = vadd.f32 %v1355, %v1367
    %v1369 = vpop.f32.mrf.mxu0
    %1370 = vdwg.mxu0
    %1371 = vmatpush.bf16.msra.mxu0 0
    %1372 = vmatpush.bf16.msra.mxu0 0
    %1373 = vmatpush.bf16.msra.mxu0 0
    %1374 = vmatpush.bf16.msra.mxu0 0
    %1375 = vmatpush.bf16.msra.mxu0 0
    %1376 = vmatpush.bf16.msra.mxu0 0
    %1377 = vmatpush.bf16.msra.mxu0 0
    %1378 = vmatpush.bf16.msra.mxu0 %v1089
    %1379 = vmatmul.bf16.gmra.mxu0 %v1291
    %v1380 = vpop.f32.mrf.mxu0
    %v1381 = vadd.f32 %v1368, %v1380
    %v1382 = vpop.f32.mrf.mxu0
    %1383 = vdwg.mxu0
    %1384 = vmatpush.bf16.msra.mxu0 %v926
    %1385 = vmatpush.bf16.msra.mxu0 %v922
    %1386 = vmatpush.bf16.msra.mxu0 %v918
    %1387 = vmatpush.bf16.msra.mxu0 %v914
    %1388 = vmatpush.bf16.msra.mxu0 %v910
    %1389 = vmatpush.bf16.msra.mxu0 %v906
    %1390 = vmatpush.bf16.msra.mxu0 %v902
    %1391 = vmatpush.bf16.msra.mxu0 %v898
    %1392 = vmatmul.bf16.gmra.mxu0 %v96
    %v1393 = vpop.f32.mrf.mxu0
    %v1394 = vadd.f32 %v302, %v1393
    %v1395 = vpop.f32.mrf.mxu0
    %1396 = vdwg.mxu0
    %1397 = vmatpush.bf16.msra.mxu0 %v958
    %1398 = vmatpush.bf16.msra.mxu0 %v954
    %1399 = vmatpush.bf16.msra.mxu0 %v950
    %1400 = vmatpush.bf16.msra.mxu0 %v946
    %1401 = vmatpush.bf16.msra.mxu0 %v942
    %1402 = vmatpush.bf16.msra.mxu0 %v938
    %1403 = vmatpush.bf16.msra.mxu0 %v934
    %1404 = vmatpush.bf16.msra.mxu0 %v930
    %1405 = vmatmul.bf16.gmra.mxu0 %v97
    %v1406 = vpop.f32.mrf.mxu0
    %v1407 = vadd.f32 %v1394, %v1406
    %v1408 = vpop.f32.mrf.mxu0
    %1409 = vdwg.mxu0
    %1410 = vmatpush.bf16.msra.mxu0 %v990
    %1411 = vmatpush.bf16.msra.mxu0 %v986
    %1412 = vmatpush.bf16.msra.mxu0 %v982
    %1413 = vmatpush.bf16.msra.mxu0 %v978
    %1414 = vmatpush.bf16.msra.mxu0 %v974
    %1415 = vmatpush.bf16.msra.mxu0 %v970
    %1416 = vmatpush.bf16.msra.mxu0 %v966
    %1417 = vmatpush.bf16.msra.mxu0 %v962
    %1418 = vmatmul.bf16.gmra.mxu0 %v98
    %v1419 = vpop.f32.mrf.mxu0
    %v1420 = vadd.f32 %v1407, %v1419
    %v1421 = vpop.f32.mrf.mxu0
    %1422 = vdwg.mxu0
    %1423 = vmatpush.bf16.msra.mxu0 %v1022
    %1424 = vmatpush.bf16.msra.mxu0 %v1018
    %1425 = vmatpush.bf16.msra.mxu0 %v1014
    %1426 = vmatpush.bf16.msra.mxu0 %v1010
    %1427 = vmatpush.bf16.msra.mxu0 %v1006
    %1428 = vmatpush.bf16.msra.mxu0 %v1002
    %1429 = vmatpush.bf16.msra.mxu0 %v998
    %1430 = vmatpush.bf16.msra.mxu0 %v994
    %1431 = vmatmul.bf16.gmra.mxu0 %v99
    %v1432 = vpop.f32.mrf.mxu0
    %v1433 = vadd.f32 %v1420, %v1432
    %v1434 = vpop.f32.mrf.mxu0
    %1435 = vdwg.mxu0
    %1436 = vmatpush.bf16.msra.mxu0 %v1054
    %1437 = vmatpush.bf16.msra.mxu0 %v1050
    %1438 = vmatpush.bf16.msra.mxu0 %v1046
    %1439 = vmatpush.bf16.msra.mxu0 %v1042
    %1440 = vmatpush.bf16.msra.mxu0 %v1038
    %1441 = vmatpush.bf16.msra.mxu0 %v1034
    %1442 = vmatpush.bf16.msra.mxu0 %v1030
    %1443 = vmatpush.bf16.msra.mxu0 %v1026
    %1444 = vmatmul.bf16.gmra.mxu0 %v100
    %v1445 = vpop.f32.mrf.mxu0
    %v1446 = vadd.f32 %v1433, %v1445
    %v1447 = vpop.f32.mrf.mxu0
    %1448 = vdwg.mxu0
    %1449 = vmatpush.bf16.msra.mxu0 %v1086
    %1450 = vmatpush.bf16.msra.mxu0 %v1082
    %1451 = vmatpush.bf16.msra.mxu0 %v1078
    %1452 = vmatpush.bf16.msra.mxu0 %v1074
    %1453 = vmatpush.bf16.msra.mxu0 %v1070
    %1454 = vmatpush.bf16.msra.mxu0 %v1066
    %1455 = vmatpush.bf16.msra.mxu0 %v1062
    %1456 = vmatpush.bf16.msra.mxu0 %v1058
    %1457 = vmatmul.bf16.gmra.mxu0 %v101
    %v1458 = vpop.f32.mrf.mxu0
    %v1459 = vadd.f32 %v1446, %v1458
    %v1460 = vpop.f32.mrf.mxu0
    %1461 = vdwg.mxu0
    %1462 = vmatpush.bf16.msra.mxu0 0
    %1463 = vmatpush.bf16.msra.mxu0 0
    %1464 = vmatpush.bf16.msra.mxu0 0
    %1465 = vmatpush.bf16.msra.mxu0 0
    %1466 = vmatpush.bf16.msra.mxu0 0
    %1467 = vmatpush.bf16.msra.mxu0 0
    %1468 = vmatpush.bf16.msra.mxu0 0
    %1469 = vmatpush.bf16.msra.mxu0 %v1090
    %1470 = vmatmul.bf16.gmra.mxu0 %v1291
    %v1471 = vpop.f32.mrf.mxu0
    %v1472 = vadd.f32 %v1459, %v1471
    %v1473 = vpop.f32.mrf.mxu0
    %1474 = vdwg.mxu0
    %1475 = vmatpush.bf16.msra.mxu0 %v927
    %1476 = vmatpush.bf16.msra.mxu0 %v923
    %1477 = vmatpush.bf16.msra.mxu0 %v919
    %1478 = vmatpush.bf16.msra.mxu0 %v915
    %1479 = vmatpush.bf16.msra.mxu0 %v911
    %1480 = vmatpush.bf16.msra.mxu0 %v907
    %1481 = vmatpush.bf16.msra.mxu0 %v903
    %1482 = vmatpush.bf16.msra.mxu0 %v899
    %1483 = vmatmul.bf16.gmra.mxu0 %v96
    %v1484 = vpop.f32.mrf.mxu0
    %v1485 = vadd.f32 %v303, %v1484
    %v1486 = vpop.f32.mrf.mxu0
    %1487 = vdwg.mxu0
    %1488 = vmatpush.bf16.msra.mxu0 %v959
    %1489 = vmatpush.bf16.msra.mxu0 %v955
    %1490 = vmatpush.bf16.msra.mxu0 %v951
    %1491 = vmatpush.bf16.msra.mxu0 %v947
    %1492 = vmatpush.bf16.msra.mxu0 %v943
    %1493 = vmatpush.bf16.msra.mxu0 %v939
    %1494 = vmatpush.bf16.msra.mxu0 %v935
    %1495 = vmatpush.bf16.msra.mxu0 %v931
    %1496 = vmatmul.bf16.gmra.mxu0 %v97
    %v1497 = vpop.f32.mrf.mxu0
    %v1498 = vadd.f32 %v1485, %v1497
    %v1499 = vpop.f32.mrf.mxu0
    %1500 = vdwg.mxu0
    %1501 = vmatpush.bf16.msra.mxu0 %v991
    %1502 = vmatpush.bf16.msra.mxu0 %v987
    %1503 = vmatpush.bf16.msra.mxu0 %v983
    %1504 = vmatpush.bf16.msra.mxu0 %v979
    %1505 = vmatpush.bf16.msra.mxu0 %v975
    %1506 = vmatpush.bf16.msra.mxu0 %v971
    %1507 = vmatpush.bf16.msra.mxu0 %v967
    %1508 = vmatpush.bf16.msra.mxu0 %v963
    %1509 = vmatmul.bf16.gmra.mxu0 %v98
    %v1510 = vpop.f32.mrf.mxu0
    %v1511 = vadd.f32 %v1498, %v1510
    %v1512 = vpop.f32.mrf.mxu0
    %1513 = vdwg.mxu0
    %1514 = vmatpush.bf16.msra.mxu0 %v1023
    %1515 = vmatpush.bf16.msra.mxu0 %v1019
    %1516 = vmatpush.bf16.msra.mxu0 %v1015
    %1517 = vmatpush.bf16.msra.mxu0 %v1011
    %1518 = vmatpush.bf16.msra.mxu0 %v1007
    %1519 = vmatpush.bf16.msra.mxu0 %v1003
    %1520 = vmatpush.bf16.msra.mxu0 %v999
    %1521 = vmatpush.bf16.msra.mxu0 %v995
    %1522 = vmatmul.bf16.gmra.mxu0 %v99
    %v1523 = vpop.f32.mrf.mxu0
    %v1524 = vadd.f32 %v1511, %v1523
    %v1525 = vpop.f32.mrf.mxu0
    %1526 = vdwg.mxu0
    %1527 = vmatpush.bf16.msra.mxu0 %v1055
    %1528 = vmatpush.bf16.msra.mxu0 %v1051
    %1529 = vmatpush.bf16.msra.mxu0 %v1047
    %1530 = vmatpush.bf16.msra.mxu0 %v1043
    %1531 = vmatpush.bf16.msra.mxu0 %v1039
    %1532 = vmatpush.bf16.msra.mxu0 %v1035
    %1533 = vmatpush.bf16.msra.mxu0 %v1031
    %1534 = vmatpush.bf16.msra.mxu0 %v1027
    %1535 = vmatmul.bf16.gmra.mxu0 %v100
    %v1536 = vpop.f32.mrf.mxu0
    %v1537 = vadd.f32 %v1524, %v1536
    %v1538 = vpop.f32.mrf.mxu0
    %1539 = vdwg.mxu0
    %1540 = vmatpush.bf16.msra.mxu0 %v1087
    %1541 = vmatpush.bf16.msra.mxu0 %v1083
    %1542 = vmatpush.bf16.msra.mxu0 %v1079
    %1543 = vmatpush.bf16.msra.mxu0 %v1075
    %1544 = vmatpush.bf16.msra.mxu0 %v1071
    %1545 = vmatpush.bf16.msra.mxu0 %v1067
    %1546 = vmatpush.bf16.msra.mxu0 %v1063
    %1547 = vmatpush.bf16.msra.mxu0 %v1059
    %1548 = vmatmul.bf16.gmra.mxu0 %v101
    %v1549 = vpop.f32.mrf.mxu0
    %v1550 = vadd.f32 %v1537, %v1549
    %v1551 = vpop.f32.mrf.mxu0
    %1552 = vdwg.mxu0
    %1553 = vmatpush.bf16.msra.mxu0 0
    %1554 = vmatpush.bf16.msra.mxu0 0
    %1555 = vmatpush.bf16.msra.mxu0 0
    %1556 = vmatpush.bf16.msra.mxu0 0
    %1557 = vmatpush.bf16.msra.mxu0 0
    %1558 = vmatpush.bf16.msra.mxu0 0
    %1559 = vmatpush.bf16.msra.mxu0 0
    %1560 = vmatpush.bf16.msra.mxu0 %v1091
    %1561 = vmatmul.bf16.gmra.mxu0 %v1291
    %v1562 = vpop.f32.mrf.mxu0
    %v1563 = vadd.f32 %v1550, %v1562
    %v1564 = vpop.f32.mrf.mxu0
    %1565 = vdwg.mxu0
    %1566 = vmatpush.bf16.msra.mxu0 %v928
    %1567 = vmatpush.bf16.msra.mxu0 %v924
    %1568 = vmatpush.bf16.msra.mxu0 %v920
    %1569 = vmatpush.bf16.msra.mxu0 %v916
    %1570 = vmatpush.bf16.msra.mxu0 %v912
    %1571 = vmatpush.bf16.msra.mxu0 %v908
    %1572 = vmatpush.bf16.msra.mxu0 %v904
    %1573 = vmatpush.bf16.msra.mxu0 %v900
    %1574 = vmatmul.bf16.gmra.mxu0 %v96
    %v1575 = vpop.f32.mrf.mxu0
    %v1576 = vadd.f32 %v304, %v1575
    %v1577 = vpop.f32.mrf.mxu0
    %1578 = vdwg.mxu0
    %1579 = vmatpush.bf16.msra.mxu0 %v960
    %1580 = vmatpush.bf16.msra.mxu0 %v956
    %1581 = vmatpush.bf16.msra.mxu0 %v952
    %1582 = vmatpush.bf16.msra.mxu0 %v948
    %1583 = vmatpush.bf16.msra.mxu0 %v944
    %1584 = vmatpush.bf16.msra.mxu0 %v940
    %1585 = vmatpush.bf16.msra.mxu0 %v936
    %1586 = vmatpush.bf16.msra.mxu0 %v932
    %1587 = vmatmul.bf16.gmra.mxu0 %v97
    %v1588 = vpop.f32.mrf.mxu0
    %v1589 = vadd.f32 %v1576, %v1588
    %v1590 = vpop.f32.mrf.mxu0
    %1591 = vdwg.mxu0
    %1592 = vmatpush.bf16.msra.mxu0 %v992
    %1593 = vmatpush.bf16.msra.mxu0 %v988
    %1594 = vmatpush.bf16.msra.mxu0 %v984
    %1595 = vmatpush.bf16.msra.mxu0 %v980
    %1596 = vmatpush.bf16.msra.mxu0 %v976
    %1597 = vmatpush.bf16.msra.mxu0 %v972
    %1598 = vmatpush.bf16.msra.mxu0 %v968
    %1599 = vmatpush.bf16.msra.mxu0 %v964
    %1600 = vmatmul.bf16.gmra.mxu0 %v98
    %v1601 = vpop.f32.mrf.mxu0
    %v1602 = vadd.f32 %v1589, %v1601
    %v1603 = vpop.f32.mrf.mxu0
    %1604 = vdwg.mxu0
    %1605 = vmatpush.bf16.msra.mxu0 %v1024
    %1606 = vmatpush.bf16.msra.mxu0 %v1020
    %1607 = vmatpush.bf16.msra.mxu0 %v1016
    %1608 = vmatpush.bf16.msra.mxu0 %v1012
    %1609 = vmatpush.bf16.msra.mxu0 %v1008
    %1610 = vmatpush.bf16.msra.mxu0 %v1004
    %1611 = vmatpush.bf16.msra.mxu0 %v1000
    %1612 = vmatpush.bf16.msra.mxu0 %v996
    %1613 = vmatmul.bf16.gmra.mxu0 %v99
    %v1614 = vpop.f32.mrf.mxu0
    %v1615 = vadd.f32 %v1602, %v1614
    %v1616 = vpop.f32.mrf.mxu0
    %1617 = vdwg.mxu0
    %1618 = vmatpush.bf16.msra.mxu0 %v1056
    %1619 = vmatpush.bf16.msra.mxu0 %v1052
    %1620 = vmatpush.bf16.msra.mxu0 %v1048
    %1621 = vmatpush.bf16.msra.mxu0 %v1044
    %1622 = vmatpush.bf16.msra.mxu0 %v1040
    %1623 = vmatpush.bf16.msra.mxu0 %v1036
    %1624 = vmatpush.bf16.msra.mxu0 %v1032
    %1625 = vmatpush.bf16.msra.mxu0 %v1028
    %1626 = vmatmul.bf16.gmra.mxu0 %v100
    %v1627 = vpop.f32.mrf.mxu0
    %v1628 = vadd.f32 %v1615, %v1627
    %v1629 = vpop.f32.mrf.mxu0
    %1630 = vdwg.mxu0
    %1631 = vmatpush.bf16.msra.mxu0 %v1088
    %1632 = vmatpush.bf16.msra.mxu0 %v1084
    %1633 = vmatpush.bf16.msra.mxu0 %v1080
    %1634 = vmatpush.bf16.msra.mxu0 %v1076
    %1635 = vmatpush.bf16.msra.mxu0 %v1072
    %1636 = vmatpush.bf16.msra.mxu0 %v1068
    %1637 = vmatpush.bf16.msra.mxu0 %v1064
    %1638 = vmatpush.bf16.msra.mxu0 %v1060
    %1639 = vmatmul.bf16.gmra.mxu0 %v101
    %v1640 = vpop.f32.mrf.mxu0
    %v1641 = vadd.f32 %v1628, %v1640
    %v1642 = vpop.f32.mrf.mxu0
    %1643 = vdwg.mxu0
    %1644 = vmatpush.bf16.msra.mxu0 0
    %1645 = vmatpush.bf16.msra.mxu0 0
    %1646 = vmatpush.bf16.msra.mxu0 0
    %1647 = vmatpush.bf16.msra.mxu0 0
    %1648 = vmatpush.bf16.msra.mxu0 0
    %1649 = vmatpush.bf16.msra.mxu0 0
    %1650 = vmatpush.bf16.msra.mxu0 0
    %1651 = vmatpush.bf16.msra.mxu0 %v1092
    %1652 = vmatmul.bf16.gmra.mxu0 %v1291
    %v1653 = vpop.f32.mrf.mxu0
    %v1654 = vadd.f32 %v1641, %v1653
    %v1655 = vpop.f32.mrf.mxu0
    %1656 = vdwg.mxu0
    %vm1657 = vcmp.gt.f32.partialorder %v1381, 0.0
    %vm1658 = vcmp.gt.f32.partialorder %v1472, 0.0
    %vm1659 = vcmp.gt.f32.partialorder %v1563, 0.0
    %vm1660 = vcmp.gt.f32.partialorder %v1654, 0.0
    %v1661 = vmul.f32 %v1381, 0.2
    %v1662 = vmul.f32 %v1472, 0.2
    %v1663 = vmul.f32 %v1563, 0.2
    %v1664 = vmul.f32 %v1654, 0.2
    %v1665 = vsel %vm1657, %v1381, %v1661
    %v1666 = vsel %vm1658, %v1472, %v1662
    %v1667 = vsel %vm1659, %v1563, %v1663
    %v1668 = vsel %vm1660, %v1654, %v1664
    %v1669 = vpack.c.bf16 %v1665, %v1665
    %v1670 = vpack.c.bf16 %v1666, %v1666
    %v1671 = vpack.c.bf16 %v1667, %v1667
    %v1672 = vpack.c.bf16 %v1668, %v1668
    %v1673 = vld [vmem:[#allocation9] sm:$0xff]
    %v1674 = vld [vmem:[#allocation9 + $0x8] sm:$0xff]
    %v1675 = vld [vmem:[#allocation9 + $0x10] sm:$0xff]
    %v1676 = vld [vmem:[#allocation9 + $0x18] sm:$0xff]
    %v1677 = vld [vmem:[#allocation9 + $0x20] sm:$0xff]
    %v1678 = vld [vmem:[#allocation9 + $0x28] sm:$0xff]
    %v1679 = vld [vmem:[#allocation9 + $0x30] sm:$0xff]
    %v1680 = vld [vmem:[#allocation9 + $0x38] sm:$0xff]
    %v1681 = vld [vmem:[#allocation9 + $0x40] sm:$0xff]
    %v1682 = vld [vmem:[#allocation9 + $0x48] sm:$0xff]
    %v1683 = vld [vmem:[#allocation9 + $0x50] sm:$0xff]
    %v1684 = vld [vmem:[#allocation9 + $0x58] sm:$0xff]
    %v1685 = vld [vmem:[#allocation9 + $0x60] sm:$0xff]
    %v1686 = vld [vmem:[#allocation9 + $0x68] sm:$0xff]
    %v1687 = vld [vmem:[#allocation9 + $0x70] sm:$0xff]
    %v1688 = vld [vmem:[#allocation9 + $0x78] sm:$0xff]
    %v1689 = vld [vmem:[#allocation9 + $0x80] sm:$0xff]
    %v1690 = vld [vmem:[#allocation9 + $0x88] sm:$0xff]
    %v1691 = vld [vmem:[#allocation9 + $0x90] sm:$0xff]
    %v1692 = vld [vmem:[#allocation9 + $0x98] sm:$0xff]
    %v1693 = vld [vmem:[#allocation9 + $0xa0] sm:$0xff]
    %v1694 = vld [vmem:[#allocation9 + $0xa8] sm:$0xff]
    %v1695 = vld [vmem:[#allocation9 + $0xb0] sm:$0xff]
    %v1696 = vld [vmem:[#allocation9 + $0xb8] sm:$0xff]
    %v1697 = vld [vmem:[#allocation9 + $0xc0] sm:$0xff]
    %v1698 = vld [vmem:[#allocation9 + $0xc8] sm:$0xff]
    %v1699 = vld [vmem:[#allocation9 + $0xd0] sm:$0xff]
    %v1700 = vld [vmem:[#allocation9 + $0xd8] sm:$0xff]
    %v1701 = vld [vmem:[#allocation9 + $0xe0] sm:$0xff]
    %v1702 = vld [vmem:[#allocation9 + $0xe8] sm:$0xff]
    %v1703 = vld [vmem:[#allocation9 + $0xf0] sm:$0xff]
    %v1704 = vld [vmem:[#allocation9 + $0xf8] sm:$0xff]
    %v1705 = vld [vmem:[#allocation9 + $0x100] sm:$0xff]
    %v1706 = vld [vmem:[#allocation9 + $0x108] sm:$0xff]
    %v1707 = vld [vmem:[#allocation9 + $0x110] sm:$0xff]
    %v1708 = vld [vmem:[#allocation9 + $0x118] sm:$0xff]
    %v1709 = vld [vmem:[#allocation9 + $0x120] sm:$0xff]
    %v1710 = vld [vmem:[#allocation9 + $0x128] sm:$0xff]
    %v1711 = vld [vmem:[#allocation9 + $0x130] sm:$0xff]
    %v1712 = vld [vmem:[#allocation9 + $0x138] sm:$0xff]
    %v1713 = vld [vmem:[#allocation9 + $0x140] sm:$0xff]
    %v1714 = vld [vmem:[#allocation9 + $0x148] sm:$0xff]
    %v1715 = vld [vmem:[#allocation9 + $0x150] sm:$0xff]
    %v1716 = vld [vmem:[#allocation9 + $0x158] sm:$0xff]
    %v1717 = vld [vmem:[#allocation9 + $0x160] sm:$0xff]
    %v1718 = vld [vmem:[#allocation9 + $0x168] sm:$0xff]
    %v1719 = vld [vmem:[#allocation9 + $0x170] sm:$0xff]
    %v1720 = vld [vmem:[#allocation9 + $0x178] sm:$0xff]
    %v1721 = vld [vmem:[#allocation9 + $0x180] sm:$0xff]
    %v1722 = vld [vmem:[#allocation9 + $0x188] sm:$0xff]
    %v1723 = vld [vmem:[#allocation9 + $0x190] sm:$0xff]
    %v1724 = vld [vmem:[#allocation9 + $0x198] sm:$0xff]
    %v1725 = vld [vmem:[#allocation9 + $0x1a0] sm:$0xff]
    %v1726 = vld [vmem:[#allocation9 + $0x1a8] sm:$0xff]
    %v1727 = vld [vmem:[#allocation9 + $0x1b0] sm:$0xff]
    %v1728 = vld [vmem:[#allocation9 + $0x1b8] sm:$0xff]
    %v1729 = vld [vmem:[#allocation9 + $0x1c0] sm:$0xff]
    %v1730 = vld [vmem:[#allocation9 + $0x1c8] sm:$0xff]
    %v1731 = vld [vmem:[#allocation9 + $0x1d0] sm:$0xff]
    %v1732 = vld [vmem:[#allocation9 + $0x1d8] sm:$0xff]
    %v1733 = vld [vmem:[#allocation9 + $0x1e0] sm:$0xff]
    %v1734 = vld [vmem:[#allocation9 + $0x1e8] sm:$0xff]
    %v1735 = vld [vmem:[#allocation9 + $0x1f0] sm:$0xff]
    %v1736 = vld [vmem:[#allocation9 + $0x1f8] sm:$0xff]
    %v1737 = vld [vmem:[%s4] sm:$0x3]
    %v1739 = vperm.slane %v1737, 0
    %v1740 = vperm.slane %v1737, 1
    %v1807 = vunpack.c.l.b16 %v1673
    %v1808 = vunpack.c.h.b16 %v1673
    %v1809 = vunpack.c.l.b16 %v1674
    %v1810 = vunpack.c.h.b16 %v1674
    %v1811 = vunpack.c.l.b16 %v1675
    %v1812 = vunpack.c.h.b16 %v1675
    %v1813 = vunpack.c.l.b16 %v1676
    %v1814 = vunpack.c.h.b16 %v1676
    %v1815 = vunpack.c.l.b16 %v1677
    %v1816 = vunpack.c.h.b16 %v1677
    %v1817 = vunpack.c.l.b16 %v1678
    %v1818 = vunpack.c.h.b16 %v1678
    %v1819 = vunpack.c.l.b16 %v1679
    %v1820 = vunpack.c.h.b16 %v1679
    %v1821 = vunpack.c.l.b16 %v1680
    %v1822 = vunpack.c.h.b16 %v1680
    %v1823 = vunpack.c.l.b16 %v1681
    %v1824 = vunpack.c.h.b16 %v1681
    %v1825 = vunpack.c.l.b16 %v1682
    %v1826 = vunpack.c.h.b16 %v1682
    %v1827 = vunpack.c.l.b16 %v1683
    %v1828 = vunpack.c.h.b16 %v1683
    %v1829 = vunpack.c.l.b16 %v1684
    %v1830 = vunpack.c.h.b16 %v1684
    %v1831 = vunpack.c.l.b16 %v1685
    %v1832 = vunpack.c.h.b16 %v1685
    %v1833 = vunpack.c.l.b16 %v1686
    %v1834 = vunpack.c.h.b16 %v1686
    %v1835 = vunpack.c.l.b16 %v1687
    %v1836 = vunpack.c.h.b16 %v1687
    %v1837 = vunpack.c.l.b16 %v1688
    %v1838 = vunpack.c.h.b16 %v1688
    %v1839 = vunpack.c.l.b16 %v1689
    %v1840 = vunpack.c.h.b16 %v1689
    %v1841 = vunpack.c.l.b16 %v1690
    %v1842 = vunpack.c.h.b16 %v1690
    %v1843 = vunpack.c.l.b16 %v1691
    %v1844 = vunpack.c.h.b16 %v1691
    %v1845 = vunpack.c.l.b16 %v1692
    %v1846 = vunpack.c.h.b16 %v1692
    %v1847 = vunpack.c.l.b16 %v1693
    %v1848 = vunpack.c.h.b16 %v1693
    %v1849 = vunpack.c.l.b16 %v1694
    %v1850 = vunpack.c.h.b16 %v1694
    %v1851 = vunpack.c.l.b16 %v1695
    %v1852 = vunpack.c.h.b16 %v1695
    %v1853 = vunpack.c.l.b16 %v1696
    %v1854 = vunpack.c.h.b16 %v1696
    %v1855 = vunpack.c.l.b16 %v1697
    %v1856 = vunpack.c.h.b16 %v1697
    %v1857 = vunpack.c.l.b16 %v1698
    %v1858 = vunpack.c.h.b16 %v1698
    %v1859 = vunpack.c.l.b16 %v1699
    %v1860 = vunpack.c.h.b16 %v1699
    %v1861 = vunpack.c.l.b16 %v1700
    %v1862 = vunpack.c.h.b16 %v1700
    %v1863 = vunpack.c.l.b16 %v1701
    %v1864 = vunpack.c.h.b16 %v1701
    %v1865 = vunpack.c.l.b16 %v1702
    %v1866 = vunpack.c.h.b16 %v1702
    %v1867 = vunpack.c.l.b16 %v1703
    %v1868 = vunpack.c.h.b16 %v1703
    %v1869 = vunpack.c.l.b16 %v1704
    %v1870 = vunpack.c.h.b16 %v1704
    %v1871 = vunpack.c.l.b16 %v1705
    %v1872 = vunpack.c.h.b16 %v1705
    %v1873 = vunpack.c.l.b16 %v1706
    %v1874 = vunpack.c.h.b16 %v1706
    %v1875 = vunpack.c.l.b16 %v1707
    %v1876 = vunpack.c.h.b16 %v1707
    %v1877 = vunpack.c.l.b16 %v1708
    %v1878 = vunpack.c.h.b16 %v1708
    %v1879 = vunpack.c.l.b16 %v1709
    %v1880 = vunpack.c.h.b16 %v1709
    %v1881 = vunpack.c.l.b16 %v1710
    %v1882 = vunpack.c.h.b16 %v1710
    %v1883 = vunpack.c.l.b16 %v1711
    %v1884 = vunpack.c.h.b16 %v1711
    %v1885 = vunpack.c.l.b16 %v1712
    %v1886 = vunpack.c.h.b16 %v1712
    %v1887 = vunpack.c.l.b16 %v1713
    %v1888 = vunpack.c.h.b16 %v1713
    %v1889 = vunpack.c.l.b16 %v1714
    %v1890 = vunpack.c.h.b16 %v1714
    %v1891 = vunpack.c.l.b16 %v1715
    %v1892 = vunpack.c.h.b16 %v1715
    %v1893 = vunpack.c.l.b16 %v1716
    %v1894 = vunpack.c.h.b16 %v1716
    %v1895 = vunpack.c.l.b16 %v1717
    %v1896 = vunpack.c.h.b16 %v1717
    %v1897 = vunpack.c.l.b16 %v1718
    %v1898 = vunpack.c.h.b16 %v1718
    %v1899 = vunpack.c.l.b16 %v1719
    %v1900 = vunpack.c.h.b16 %v1719
    %v1901 = vunpack.c.l.b16 %v1720
    %v1902 = vunpack.c.h.b16 %v1720
    %v1903 = vunpack.c.l.b16 %v1721
    %v1904 = vunpack.c.h.b16 %v1721
    %v1905 = vunpack.c.l.b16 %v1722
    %v1906 = vunpack.c.h.b16 %v1722
    %v1907 = vunpack.c.l.b16 %v1723
    %v1908 = vunpack.c.h.b16 %v1723
    %v1909 = vunpack.c.l.b16 %v1724
    %v1910 = vunpack.c.h.b16 %v1724
    %v1911 = vunpack.c.l.b16 %v1725
    %v1912 = vunpack.c.h.b16 %v1725
    %v1913 = vunpack.c.l.b16 %v1726
    %v1914 = vunpack.c.h.b16 %v1726
    %v1915 = vunpack.c.l.b16 %v1727
    %v1916 = vunpack.c.h.b16 %v1727
    %v1917 = vunpack.c.l.b16 %v1728
    %v1918 = vunpack.c.h.b16 %v1728
    %v1919 = vunpack.c.l.b16 %v1729
    %v1920 = vunpack.c.h.b16 %v1729
    %v1921 = vunpack.c.l.b16 %v1730
    %v1922 = vunpack.c.h.b16 %v1730
    %v1923 = vunpack.c.l.b16 %v1731
    %v1924 = vunpack.c.h.b16 %v1731
    %v1925 = vunpack.c.l.b16 %v1732
    %v1926 = vunpack.c.h.b16 %v1732
    %v1927 = vunpack.c.l.b16 %v1733
    %v1928 = vunpack.c.h.b16 %v1733
    %v1929 = vunpack.c.l.b16 %v1734
    %v1930 = vunpack.c.h.b16 %v1734
    %v1931 = vunpack.c.l.b16 %v1735
    %v1932 = vunpack.c.h.b16 %v1735
    %v1933 = vunpack.c.l.b16 %v1736
    %v1934 = vunpack.c.h.b16 %v1736
    %v1935 = vpack.c.b16 %v1809, %v1807
    %v1936 = vpack.c.b16 %v1810, %v1808
    %v1937 = vpack.c.b16 %v1813, %v1811
    %v1938 = vpack.c.b16 %v1814, %v1812
    %v1939 = vpack.c.b16 %v1817, %v1815
    %v1940 = vpack.c.b16 %v1818, %v1816
    %v1941 = vpack.c.b16 %v1821, %v1819
    %v1942 = vpack.c.b16 %v1822, %v1820
    %v1943 = vpack.c.b16 %v1825, %v1823
    %v1944 = vpack.c.b16 %v1826, %v1824
    %v1945 = vpack.c.b16 %v1829, %v1827
    %v1946 = vpack.c.b16 %v1830, %v1828
    %v1947 = vpack.c.b16 %v1833, %v1831
    %v1948 = vpack.c.b16 %v1834, %v1832
    %v1949 = vpack.c.b16 %v1837, %v1835
    %v1950 = vpack.c.b16 %v1838, %v1836
    %v1951 = vpack.c.b16 %v1841, %v1839
    %v1952 = vpack.c.b16 %v1842, %v1840
    %v1953 = vpack.c.b16 %v1845, %v1843
    %v1954 = vpack.c.b16 %v1846, %v1844
    %v1955 = vpack.c.b16 %v1849, %v1847
    %v1956 = vpack.c.b16 %v1850, %v1848
    %v1957 = vpack.c.b16 %v1853, %v1851
    %v1958 = vpack.c.b16 %v1854, %v1852
    %v1959 = vpack.c.b16 %v1857, %v1855
    %v1960 = vpack.c.b16 %v1858, %v1856
    %v1961 = vpack.c.b16 %v1861, %v1859
    %v1962 = vpack.c.b16 %v1862, %v1860
    %v1963 = vpack.c.b16 %v1865, %v1863
    %v1964 = vpack.c.b16 %v1866, %v1864
    %v1965 = vpack.c.b16 %v1869, %v1867
    %v1966 = vpack.c.b16 %v1870, %v1868
    %v1967 = vpack.c.b16 %v1873, %v1871
    %v1968 = vpack.c.b16 %v1874, %v1872
    %v1969 = vpack.c.b16 %v1877, %v1875
    %v1970 = vpack.c.b16 %v1878, %v1876
    %v1971 = vpack.c.b16 %v1881, %v1879
    %v1972 = vpack.c.b16 %v1882, %v1880
    %v1973 = vpack.c.b16 %v1885, %v1883
    %v1974 = vpack.c.b16 %v1886, %v1884
    %v1975 = vpack.c.b16 %v1889, %v1887
    %v1976 = vpack.c.b16 %v1890, %v1888
    %v1977 = vpack.c.b16 %v1893, %v1891
    %v1978 = vpack.c.b16 %v1894, %v1892
    %v1979 = vpack.c.b16 %v1897, %v1895
    %v1980 = vpack.c.b16 %v1898, %v1896
    %v1981 = vpack.c.b16 %v1901, %v1899
    %v1982 = vpack.c.b16 %v1902, %v1900
    %v1983 = vpack.c.b16 %v1905, %v1903
    %v1984 = vpack.c.b16 %v1906, %v1904
    %v1985 = vpack.c.b16 %v1909, %v1907
    %v1986 = vpack.c.b16 %v1910, %v1908
    %v1987 = vpack.c.b16 %v1913, %v1911
    %v1988 = vpack.c.b16 %v1914, %v1912
    %v1989 = vpack.c.b16 %v1917, %v1915
    %v1990 = vpack.c.b16 %v1918, %v1916
    %v1991 = vpack.c.b16 %v1921, %v1919
    %v1992 = vpack.c.b16 %v1922, %v1920
    %v1993 = vpack.c.b16 %v1925, %v1923
    %v1994 = vpack.c.b16 %v1926, %v1924
    %v1995 = vpack.c.b16 %v1929, %v1927
    %v1996 = vpack.c.b16 %v1930, %v1928
    %v1997 = vpack.c.b16 %v1933, %v1931
    %v1998 = vpack.c.b16 %v1934, %v1932
    %2063 = vmatpush.bf16.msra.mxu0 %v1949
    %2064 = vmatpush.bf16.msra.mxu0 %v1947
    %2065 = vmatpush.bf16.msra.mxu0 %v1945
    %2066 = vmatpush.bf16.msra.mxu0 %v1943
    %2067 = vmatpush.bf16.msra.mxu0 %v1941
    %2068 = vmatpush.bf16.msra.mxu0 %v1939
    %2069 = vmatpush.bf16.msra.mxu0 %v1937
    %2070 = vmatpush.bf16.msra.mxu0 %v1935
    %2071 = vmatmul.bf16.gmra.mxu0 %v1669
    %v2072 = vpop.f32.mrf.mxu0
    %v2073 = vadd.f32 %v1739, %v2072
    %v2074 = vpop.f32.mrf.mxu0
    %2075 = vdwg.mxu0
    %2076 = vmatpush.bf16.msra.mxu0 %v1965
    %2077 = vmatpush.bf16.msra.mxu0 %v1963
    %2078 = vmatpush.bf16.msra.mxu0 %v1961
    %2079 = vmatpush.bf16.msra.mxu0 %v1959
    %2080 = vmatpush.bf16.msra.mxu0 %v1957
    %2081 = vmatpush.bf16.msra.mxu0 %v1955
    %2082 = vmatpush.bf16.msra.mxu0 %v1953
    %2083 = vmatpush.bf16.msra.mxu0 %v1951
    %2084 = vmatmul.bf16.gmra.mxu0 %v1670
    %v2085 = vpop.f32.mrf.mxu0
    %v2086 = vadd.f32 %v2073, %v2085
    %v2087 = vpop.f32.mrf.mxu0
    %2088 = vdwg.mxu0
    %2089 = vmatpush.bf16.msra.mxu0 %v1981
    %2090 = vmatpush.bf16.msra.mxu0 %v1979
    %2091 = vmatpush.bf16.msra.mxu0 %v1977
    %2092 = vmatpush.bf16.msra.mxu0 %v1975
    %2093 = vmatpush.bf16.msra.mxu0 %v1973
    %2094 = vmatpush.bf16.msra.mxu0 %v1971
    %2095 = vmatpush.bf16.msra.mxu0 %v1969
    %2096 = vmatpush.bf16.msra.mxu0 %v1967
    %2097 = vmatmul.bf16.gmra.mxu0 %v1671
    %v2098 = vpop.f32.mrf.mxu0
    %v2099 = vadd.f32 %v2086, %v2098
    %v2100 = vpop.f32.mrf.mxu0
    %2101 = vdwg.mxu0
    %2102 = vmatpush.bf16.msra.mxu0 %v1997
    %2103 = vmatpush.bf16.msra.mxu0 %v1995
    %2104 = vmatpush.bf16.msra.mxu0 %v1993
    %2105 = vmatpush.bf16.msra.mxu0 %v1991
    %2106 = vmatpush.bf16.msra.mxu0 %v1989
    %2107 = vmatpush.bf16.msra.mxu0 %v1987
    %2108 = vmatpush.bf16.msra.mxu0 %v1985
    %2109 = vmatpush.bf16.msra.mxu0 %v1983
    %2110 = vmatmul.bf16.gmra.mxu0 %v1672
    %v2111 = vpop.f32.mrf.mxu0
    %v2112 = vadd.f32 %v2099, %v2111
    %v2113 = vpop.f32.mrf.mxu0
    %2114 = vdwg.mxu0
    %2115 = vmatpush.bf16.msra.mxu0 %v1950
    %2116 = vmatpush.bf16.msra.mxu0 %v1948
    %2117 = vmatpush.bf16.msra.mxu0 %v1946
    %2118 = vmatpush.bf16.msra.mxu0 %v1944
    %2119 = vmatpush.bf16.msra.mxu0 %v1942
    %2120 = vmatpush.bf16.msra.mxu0 %v1940
    %2121 = vmatpush.bf16.msra.mxu0 %v1938
    %2122 = vmatpush.bf16.msra.mxu0 %v1936
    %2123 = vmatmul.bf16.gmra.mxu0 %v1669
    %v2124 = vpop.f32.mrf.mxu0
    %v2125 = vadd.f32 %v1740, %v2124
    %v2126 = vpop.f32.mrf.mxu0
    %2127 = vdwg.mxu0
    %2128 = vmatpush.bf16.msra.mxu0 %v1966
    %2129 = vmatpush.bf16.msra.mxu0 %v1964
    %2130 = vmatpush.bf16.msra.mxu0 %v1962
    %2131 = vmatpush.bf16.msra.mxu0 %v1960
    %2132 = vmatpush.bf16.msra.mxu0 %v1958
    %2133 = vmatpush.bf16.msra.mxu0 %v1956
    %2134 = vmatpush.bf16.msra.mxu0 %v1954
    %2135 = vmatpush.bf16.msra.mxu0 %v1952
    %2136 = vmatmul.bf16.gmra.mxu0 %v1670
    %v2137 = vpop.f32.mrf.mxu0
    %v2138 = vadd.f32 %v2125, %v2137
    %v2139 = vpop.f32.mrf.mxu0
    %2140 = vdwg.mxu0
    %2141 = vmatpush.bf16.msra.mxu0 %v1982
    %2142 = vmatpush.bf16.msra.mxu0 %v1980
    %2143 = vmatpush.bf16.msra.mxu0 %v1978
    %2144 = vmatpush.bf16.msra.mxu0 %v1976
    %2145 = vmatpush.bf16.msra.mxu0 %v1974
    %2146 = vmatpush.bf16.msra.mxu0 %v1972
    %2147 = vmatpush.bf16.msra.mxu0 %v1970
    %2148 = vmatpush.bf16.msra.mxu0 %v1968
    %2149 = vmatmul.bf16.gmra.mxu0 %v1671
    %v2150 = vpop.f32.mrf.mxu0
    %v2151 = vadd.f32 %v2138, %v2150
    %v2152 = vpop.f32.mrf.mxu0
    %2153 = vdwg.mxu0
    %2154 = vmatpush.bf16.msra.mxu0 %v1998
    %2155 = vmatpush.bf16.msra.mxu0 %v1996
    %2156 = vmatpush.bf16.msra.mxu0 %v1994
    %2157 = vmatpush.bf16.msra.mxu0 %v1992
    %2158 = vmatpush.bf16.msra.mxu0 %v1990
    %2159 = vmatpush.bf16.msra.mxu0 %v1988
    %2160 = vmatpush.bf16.msra.mxu0 %v1986
    %2161 = vmatpush.bf16.msra.mxu0 %v1984
    %2162 = vmatmul.bf16.gmra.mxu0 %v1672
    %v2163 = vpop.f32.mrf.mxu0
    %v2164 = vadd.f32 %v2151, %v2163
    %v2165 = vpop.f32.mrf.mxu0
    %2166 = vdwg.mxu0
    %vm2167 = vcmp.gt.f32.partialorder %v2112, 0.0
    %vm2168 = vcmp.gt.f32.partialorder %v2164, 0.0
    %v2169 = vmul.f32 %v2112, 0.2
    %v2170 = vmul.f32 %v2164, 0.2
    %v2171 = vsel %vm2167, %v2112, %v2169
    %v2172 = vsel %vm2168, %v2164, %v2170
    %v2173 = vld [vmem:[%s5] sm:$0x3]
    %v2175 = vperm.slane %v2173, 0
    %v2176 = vperm.slane %v2173, 1
    %v2179 = vmul.f32 %v2171, %v2175
    %v2180 = vmul.f32 %v2172, %v2176
    %v2181 = vadd.f32 %v2179, %v2180
    %2182 = vadd.xlane.f32.xlu0 %v2181
    %v2183 = vpop.xlane.xlu0 %2182
    %2184 = vxpose.xlu0.b32.start [1/16] %v2183, 128
    %2185 = vxpose.xlu0.b32.cont [2/16] 0.0, 128
    %2186 = vxpose.xlu0.b32.cont [3/16] 0.0, 128
    %2187 = vxpose.xlu0.b32.cont [4/16] 0.0, 128
    %2188 = vxpose.xlu0.b32.cont [5/16] 0.0, 128
    %2189 = vxpose.xlu0.b32.cont [6/16] 0.0, 128
    %2190 = vxpose.xlu0.b32.cont [7/16] 0.0, 128
    %2191 = vxpose.xlu0.b32.cont [8/16] 0.0, 128
    %2192 = vxpose.xlu0.b32.cont [9/16] 0.0, 128
    %2193 = vxpose.xlu0.b32.cont [10/16] 0.0, 128
    %2194 = vxpose.xlu0.b32.cont [11/16] 0.0, 128
    %2195 = vxpose.xlu0.b32.cont [12/16] 0.0, 128
    %2196 = vxpose.xlu0.b32.cont [13/16] 0.0, 128
    %2197 = vxpose.xlu0.b32.cont [14/16] 0.0, 128
    %2198 = vxpose.xlu0.b32.cont [15/16] 0.0, 128
    %2199 = vxpose.xlu0.b32.end [16/16] 0.0, 128
    %v2200 = vpop.trf.xlu0
    %v2201 = vpop.trf.xlu0
    %v2202 = vpop.trf.xlu0
    %v2203 = vpop.trf.xlu0
    %v2204 = vpop.trf.xlu0
    %v2205 = vpop.trf.xlu0
    %v2206 = vpop.trf.xlu0
    %v2207 = vpop.trf.xlu0
    %v2208 = vpop.trf.xlu0
    %v2209 = vpop.trf.xlu0
    %v2210 = vpop.trf.xlu0
    %v2211 = vpop.trf.xlu0
    %v2212 = vpop.trf.xlu0
    %v2213 = vpop.trf.xlu0
    %v2214 = vpop.trf.xlu0
    %v2215 = vpop.trf.xlu0
    %v2216 = vld [vmem:[#allocation2] sm:$0x1]
    %2218 = vset.pattern.permute.xlu0 0
    %2219 = vperm.xlu0 %2218, %v2216
    %v2220 = vpop.permute.xlu0 %2219
    %v2222 = vperm.slane %v2220, 0
    %v2223 = vadd.f32 %v2200, %v2222
    %v2224 = vxor.u32 %v2223, 2147483648
    %v2225 = vmul.f32 %v2224, 1.442695
    %v2226 = vpow.pop %v2225
    %v2227 = vadd.f32 %v2226, 1.0
    %v2228 = vrcp.pop %v2227
    %v2229 = vmul.f32 %v2227, %v2228
    %v2230 = vsub.f32 1.0, %v2229
    %v2231 = vmul.f32 %v2228, %v2230
    %v2232 = vadd.f32 %v2228, %v2231
    %vm2233 = vweird.f32 %v2227
    %vm2234 = vweird.f32 %v2228
    %vm2235 = vmor %vm2233, %vm2234
    %v2236 = vsel %vm2235, %v2228, %v2232
    %v2237 = vand.u32 2147483647, %v2227
    %vm2238 = vcmp.eq.f32.partialorder %v2237, 8.507059e+37
    %v2239 = vand.u32 %v2227, 2147483648
    %v2240 = vor.u32 1.1754944e-38, %v2239
    %v2241 = vsel %vm2238, %v2240, %v2236
    %v2242 = vmul.f32 1.0, %v2241
    %vm2243 = vcmask 57344
    %2244 = vst.msk [vmem:[#allocation11] sm:$0x1] %vm2243, %v2242
    // Predicated region
    $region46: #{tpu_custom_call.1} parent=1 // pred_check
      _
    $region47: #{tpu_custom_call.1} parent=1 // pred_check_branch
      %2246 = sbr.rel (0) target = $region49
    $region48: #{tpu_custom_call.1} parent=1 // pred_region
      %2248 = vsyncadd [#allocation5], 0
      %s2250 = sshll.u32 [#allocation11], 4
      %s2251 = int_to_ptr.vmem [resolvable:$true] %s2250
      %s2252 = sshll.u32 %s7, 4
      %s2253 = int_to_ptr.hbm [resolvable:$true] %s2252
      %2255 = dma.vmem_to_hbm [thread:$0]  %s2251, 16, %s2253, [#allocation5]
    $region49: #{tpu_custom_call.1} parent=1 // pred_fallthru
      _
    // Predicated region
    $region50: #{tpu_custom_call.1} parent=1 // pred_check
      _
    $region51: #{tpu_custom_call.1} parent=1 // pred_check_branch
      %2257 = sbr.rel (0) target = $region53
    $region52: #{tpu_custom_call.1} parent=1 // pred_region
      %2259 = dma.done [#allocation5], 16
    $region53: #{tpu_custom_call.1} parent=1 // pred_fallthru
      _
    %2260 = vsyncpa [#allocation4], 1
    %2261 = vsyncpa [#allocation7], 1
    %2262 = vsyncpa [#allocation10], 1
    %2263 = vsyncpa [#allocation5], 1

</llo_original>
